<compile_context>
chip_gen: v5e
topology: v5e:2x2
jax: 0.10.0
libtpu: 0.0.40
codegen_flags: <defaults>
</compile_context>

<pallas_src>
import jax
import jax.numpy as jnp
from jax.experimental import pallas as pl
from jax.experimental.pallas import tpu as pltpu

NEG_SLOPE = 0.01                        # default negative_slope of F.leaky_relu
_TARGET_BLOCK_BYTES = 4 * 1024 * 1024   # ~4 MiB input tile per grid step
_VMEM_LIMIT_BYTES = 32 * 1024 * 1024    # safe headroom on v5e / v6e / v7x


def _dark_downsample_kernel(x_ref, o_ref):
    # x_ref block: (2*TR, W)   -- 2*TR consecutive rows of the flat view (W on lanes)
    # o_ref block: (TR, W//2)
    x = x_ref[...]
    # leaky_relu is monotone, so applying it per element before the max is exact.
    y = jnp.where(x >= 0, x, NEG_SLOPE * x)
    r2, w = y.shape
    # Group each 2x2 pooling window: rows (2k, 2k+1) x cols (2j, 2j+1).
    y4 = y.reshape(r2 // 2, 2, w // 2, 2)
    m = jnp.max(jnp.max(y4, axis=3), axis=1)
    o_ref[...] = m.astype(o_ref.dtype)


def _pick_row_tile(r_out, in_row_bytes):
    """Output rows per grid step: divides r_out, 8-aligned, ~_TARGET_BLOCK_BYTES."""
    cap = max(1, _TARGET_BLOCK_BYTES // max(1, in_row_bytes))
    if r_out <= cap:
        return r_out                       # whole thing in one block
    best = 0
    for t in range(8, min(cap, r_out) + 1, 8):
        if r_out % t == 0:
            best = t
    return best if best else r_out


def dark_downsample(x_nchw):
    """Forward pass of Dark_DownSample. Input/output are NCHW like PyTorch."""
    n, c, h, w = x_nchw.shape
    assert h >= 2 and w >= 2, "MaxPool2d(2,2) needs H,W >= 2"
    h_e, w_e = (h // 2) * 2, (w // 2) * 2      # MaxPool2d floors odd dims
    if (h_e, w_e) != (h, w):
        x_nchw = x_nchw[:, :, :h_e, :w_e]
    h_out, w_out = h_e // 2, w_e // 2
    r_out = n * c * h_out                      # output rows of the flat view

    # Free reshape (no transpose, contiguous NCHW memory): rows = N*C*H.
    x_flat = x_nchw.reshape(n * c * h_e, w_e)

    itemsize = jnp.dtype(x_nchw.dtype).itemsize
    tr = _pick_row_tile(r_out, 2 * w_e * itemsize)   # output rows per grid step

    out_flat = pl.pallas_call(
        _dark_downsample_kernel,
        out_shape=jax.ShapeDtypeStruct((r_out, w_out), x_nchw.dtype),
        grid=(r_out // tr,),
        in_specs=[pl.BlockSpec((2 * tr, w_e), lambda i: (i, 0))],
        out_specs=pl.BlockSpec((tr, w_out), lambda i: (i, 0)),
        compiler_params=pltpu.CompilerParams(
            dimension_semantics=("parallel",),
            vmem_limit_bytes=_VMEM_LIMIT_BYTES),
    )(x_flat)

    # Free reshape back to NCHW.
    return out_flat.reshape(n, c, h_out, w_out)


def _reference_forward(x_nchw):
    """Plain-JAX reference matching the PyTorch module."""
    y = jnp.where(x_nchw >= 0, x_nchw, NEG_SLOPE * x_nchw)
    n, c, h, w = y.shape
    y = y[:, :, :(h // 2) * 2, :(w // 2) * 2]
    y = y.reshape(n, c, h // 2, 2, w // 2, 2)
    return y.max(axis=(3, 5))


if __name__ == "__main__":
    key = jax.random.PRNGKey(0)
    x = jax.random.normal(key, (2, 4, 16, 16), dtype=jnp.float32)  # N, C, H, W

    out = dark_downsample(x)
    out = jax.block_until_ready(out)

    ref = _reference_forward(x)
    assert out.shape == (2, 4, 8, 8), out.shape
    assert jnp.allclose(out, ref, atol=1e-6, rtol=1e-6), "mismatch vs reference"

    print("KERNEL_OK")
</pallas_src>

<mosaic_0001>
module attributes {stable_mosaic.version = 11 : i64} {
  func.func @_dark_downsample_kernel(%arg0: i32, %arg1: memref<128x16xf32, #tpu.memory_space<vmem>>, %arg2: memref<64x8xf32, #tpu.memory_space<vmem>>) attributes {dimension_semantics = [#tpu.dimension_semantics<parallel>], iteration_bounds = array<i64: 1>, scalar_prefetch = 0 : i64, scratch_operands = 0 : i64, tpu.core_type = #tpu.core_type<tc>, window_params = [{transform_indices = @transform_0, window_bounds = array<i64: 128, 16>}, {transform_indices = @transform_1, window_bounds = array<i64: 64, 8>}]} {
    %c0 = arith.constant 0 : index
    %c0_0 = arith.constant 0 : index
    %0 = vector.load %arg1[%c0, %c0_0] : memref<128x16xf32, #tpu.memory_space<vmem>>, vector<128x16xf32>
    %cst = arith.constant 0.000000e+00 : f32
    %1 = vector.broadcast %cst : f32 to vector<128x16xf32>
    %2 = arith.cmpf oge, %0, %1 : vector<128x16xf32>
    %cst_1 = arith.constant 0.00999999977 : f32
    %3 = vector.broadcast %cst_1 : f32 to vector<128x16xf32>
    %4 = arith.mulf %3, %0 : vector<128x16xf32>
    %5 = arith.select %2, %0, %4 : vector<128x16xi1>, vector<128x16xf32>
    %6 = vector.shape_cast %5 : vector<128x16xf32> to vector<64x2x8x2xf32>
    %cst_2 = arith.constant dense<0xFF800000> : vector<64x2x8xf32>
    %7 = vector.multi_reduction <maximumf>, %6, %cst_2 [3] : vector<64x2x8x2xf32> to vector<64x2x8xf32>
    %cst_3 = arith.constant dense<0xFF800000> : vector<64x8xf32>
    %8 = vector.multi_reduction <maximumf>, %7, %cst_3 [1] : vector<64x2x8xf32> to vector<64x8xf32>
    %c0_4 = arith.constant 0 : index
    %c0_5 = arith.constant 0 : index
    %9 = vector.load %arg2[%c0_4, %c0_5] : memref<64x8xf32, #tpu.memory_space<vmem>>, vector<64x8xf32>
    tpu.vector_store %arg2[%c0_4, %c0_5], %8 {strides = array<i32>} : memref<64x8xf32, #tpu.memory_space<vmem>>, vector<64x8xf32>,
    return
  }
  func.func @transform_0(%arg0: i32) -> (i32, i32) {
    %c0_i32 = arith.constant 0 : i32
    %c0_i32_0 = arith.constant 0 : i32
    return %arg0, %c0_i32 : i32, i32
  }
  func.func @transform_1(%arg0: i32) -> (i32, i32) {
    %c0_i32 = arith.constant 0 : i32
    %c0_i32_0 = arith.constant 0 : i32
    return %arg0, %c0_i32 : i32, i32
  }
}

</mosaic_0001>

<llo_original>
// kernel: tpu_custom_call.1
$region0: #{tpu_custom_call.1}
  #allocation0 [shape = 'u32[]', space=smem, size = 0x4, offset = 0x4, fixed_abs, tag = 'smem constant byte address 0x4 - core index']
  #allocation1 [shape = 'u32[72,128]{1,0:T(1,128)}', space=vmem, size = 0x9000, scoped, tag = 'internal scratch']
  %s0 = inlined_call_operand.vmem [shape: f32[128,16], index: 0, kind: input, shape index: {}]
  %s1 = inlined_call_operand.vmem [shape: f32[64,8], index: 1, kind: output, shape index: {}]
  %s2 = sld [smem:[#allocation0]]
  $region14: #{tpu_custom_call.1} parent=0
    _
  %s4 = ssub.s32 1, %s2
  %s5 = scalar_select 0, %s4, %s2
  // Predicated region
  $region2: #{tpu_custom_call.1} parent=0 // pred_check
    _
  $region3: #{tpu_custom_call.1} parent=0 // pred_check_branch
    %7 = sbr.rel (0) target = $region5
  $region4: #{tpu_custom_call.1} parent=0 // pred_region
    _
  $region5: #{tpu_custom_call.1} parent=0 // pred_fallthru
    _
  %v8 = vld [vmem:[%s0] sm:$0xff]
  %v9 = vld [vmem:[%s0 + $0x8] sm:$0xff]
  %v10 = vld [vmem:[%s0 + $0x10] sm:$0xff]
  %v11 = vld [vmem:[%s0 + $0x18] sm:$0xff]
  %v12 = vld [vmem:[%s0 + $0x20] sm:$0xff]
  %v13 = vld [vmem:[%s0 + $0x28] sm:$0xff]
  %v14 = vld [vmem:[%s0 + $0x30] sm:$0xff]
  %v15 = vld [vmem:[%s0 + $0x38] sm:$0xff]
  %v16 = vld [vmem:[%s0 + $0x40] sm:$0xff]
  %v17 = vld [vmem:[%s0 + $0x48] sm:$0xff]
  %v18 = vld [vmem:[%s0 + $0x50] sm:$0xff]
  %v19 = vld [vmem:[%s0 + $0x58] sm:$0xff]
  %v20 = vld [vmem:[%s0 + $0x60] sm:$0xff]
  %v21 = vld [vmem:[%s0 + $0x68] sm:$0xff]
  %v22 = vld [vmem:[%s0 + $0x70] sm:$0xff]
  %v23 = vld [vmem:[%s0 + $0x78] sm:$0xff]
  %vm24 = vcmp.ge.f32.partialorder %v8, 0.0
  %vm25 = vcmp.ge.f32.partialorder %v9, 0.0
  %vm26 = vcmp.ge.f32.partialorder %v10, 0.0
  %vm27 = vcmp.ge.f32.partialorder %v11, 0.0
  %vm28 = vcmp.ge.f32.partialorder %v12, 0.0
  %vm29 = vcmp.ge.f32.partialorder %v13, 0.0
  %vm30 = vcmp.ge.f32.partialorder %v14, 0.0
  %vm31 = vcmp.ge.f32.partialorder %v15, 0.0
  %vm32 = vcmp.ge.f32.partialorder %v16, 0.0
  %vm33 = vcmp.ge.f32.partialorder %v17, 0.0
  %vm34 = vcmp.ge.f32.partialorder %v18, 0.0
  %vm35 = vcmp.ge.f32.partialorder %v19, 0.0
  %vm36 = vcmp.ge.f32.partialorder %v20, 0.0
  %vm37 = vcmp.ge.f32.partialorder %v21, 0.0
  %vm38 = vcmp.ge.f32.partialorder %v22, 0.0
  %vm39 = vcmp.ge.f32.partialorder %v23, 0.0
  %v40 = vmul.f32 %v8, 0.01
  %v41 = vmul.f32 %v9, 0.01
  %v42 = vmul.f32 %v10, 0.01
  %v43 = vmul.f32 %v11, 0.01
  %v44 = vmul.f32 %v12, 0.01
  %v45 = vmul.f32 %v13, 0.01
  %v46 = vmul.f32 %v14, 0.01
  %v47 = vmul.f32 %v15, 0.01
  %v48 = vmul.f32 %v16, 0.01
  %v49 = vmul.f32 %v17, 0.01
  %v50 = vmul.f32 %v18, 0.01
  %v51 = vmul.f32 %v19, 0.01
  %v52 = vmul.f32 %v20, 0.01
  %v53 = vmul.f32 %v21, 0.01
  %v54 = vmul.f32 %v22, 0.01
  %v55 = vmul.f32 %v23, 0.01
  %v56 = vsel %vm24, %v8, %v40
  %v57 = vsel %vm25, %v9, %v41
  %v58 = vsel %vm26, %v10, %v42
  %v59 = vsel %vm27, %v11, %v43
  %v60 = vsel %vm28, %v12, %v44
  %v61 = vsel %vm29, %v13, %v45
  %v62 = vsel %vm30, %v14, %v46
  %v63 = vsel %vm31, %v15, %v47
  %v64 = vsel %vm32, %v16, %v48
  %v65 = vsel %vm33, %v17, %v49
  %v66 = vsel %vm34, %v18, %v50
  %v67 = vsel %vm35, %v19, %v51
  %v68 = vsel %vm36, %v20, %v52
  %v69 = vsel %vm37, %v21, %v53
  %v70 = vsel %vm38, %v22, %v54
  %v71 = vsel %vm39, %v23, %v55
  %88 = vrot.lane.b32.xlu0 %v56, 126
  %v89 = vpop.permute.xlu0 %88
  %90 = vrot.lane.b32.xlu0 %v57, 126
  %v91 = vpop.permute.xlu0 %90
  %92 = vrot.lane.b32.xlu0 %v58, 126
  %v93 = vpop.permute.xlu0 %92
  %94 = vrot.lane.b32.xlu0 %v59, 126
  %v95 = vpop.permute.xlu0 %94
  %96 = vrot.lane.b32.xlu0 %v60, 126
  %v97 = vpop.permute.xlu0 %96
  %98 = vrot.lane.b32.xlu0 %v61, 126
  %v99 = vpop.permute.xlu0 %98
  %100 = vrot.lane.b32.xlu0 %v62, 126
  %v101 = vpop.permute.xlu0 %100
  %102 = vrot.lane.b32.xlu0 %v63, 126
  %v103 = vpop.permute.xlu0 %102
  %104 = vrot.lane.b32.xlu0 %v64, 126
  %v105 = vpop.permute.xlu0 %104
  %106 = vrot.lane.b32.xlu0 %v65, 126
  %v107 = vpop.permute.xlu0 %106
  %108 = vrot.lane.b32.xlu0 %v66, 126
  %v109 = vpop.permute.xlu0 %108
  %110 = vrot.lane.b32.xlu0 %v67, 126
  %v111 = vpop.permute.xlu0 %110
  %112 = vrot.lane.b32.xlu0 %v68, 126
  %v113 = vpop.permute.xlu0 %112
  %114 = vrot.lane.b32.xlu0 %v69, 126
  %v115 = vpop.permute.xlu0 %114
  %116 = vrot.lane.b32.xlu0 %v70, 126
  %v117 = vpop.permute.xlu0 %116
  %118 = vrot.lane.b32.xlu0 %v71, 126
  %v119 = vpop.permute.xlu0 %118
  %136 = vrot.lane.b32.xlu0 %v56, 124
  %v137 = vpop.permute.xlu0 %136
  %138 = vrot.lane.b32.xlu0 %v57, 124
  %v139 = vpop.permute.xlu0 %138
  %140 = vrot.lane.b32.xlu0 %v58, 124
  %v141 = vpop.permute.xlu0 %140
  %142 = vrot.lane.b32.xlu0 %v59, 124
  %v143 = vpop.permute.xlu0 %142
  %144 = vrot.lane.b32.xlu0 %v60, 124
  %v145 = vpop.permute.xlu0 %144
  %146 = vrot.lane.b32.xlu0 %v61, 124
  %v147 = vpop.permute.xlu0 %146
  %148 = vrot.lane.b32.xlu0 %v62, 124
  %v149 = vpop.permute.xlu0 %148
  %150 = vrot.lane.b32.xlu0 %v63, 124
  %v151 = vpop.permute.xlu0 %150
  %152 = vrot.lane.b32.xlu0 %v64, 124
  %v153 = vpop.permute.xlu0 %152
  %154 = vrot.lane.b32.xlu0 %v65, 124
  %v155 = vpop.permute.xlu0 %154
  %156 = vrot.lane.b32.xlu0 %v66, 124
  %v157 = vpop.permute.xlu0 %156
  %158 = vrot.lane.b32.xlu0 %v67, 124
  %v159 = vpop.permute.xlu0 %158
  %160 = vrot.lane.b32.xlu0 %v68, 124
  %v161 = vpop.permute.xlu0 %160
  %162 = vrot.lane.b32.xlu0 %v69, 124
  %v163 = vpop.permute.xlu0 %162
  %164 = vrot.lane.b32.xlu0 %v70, 124
  %v165 = vpop.permute.xlu0 %164
  %166 = vrot.lane.b32.xlu0 %v71, 124
  %v167 = vpop.permute.xlu0 %166
  %184 = vrot.lane.b32.xlu0 %v56, 122
  %v185 = vpop.permute.xlu0 %184
  %186 = vrot.lane.b32.xlu0 %v57, 122
  %v187 = vpop.permute.xlu0 %186
  %188 = vrot.lane.b32.xlu0 %v58, 122
  %v189 = vpop.permute.xlu0 %188
  %190 = vrot.lane.b32.xlu0 %v59, 122
  %v191 = vpop.permute.xlu0 %190
  %192 = vrot.lane.b32.xlu0 %v60, 122
  %v193 = vpop.permute.xlu0 %192
  %194 = vrot.lane.b32.xlu0 %v61, 122
  %v195 = vpop.permute.xlu0 %194
  %196 = vrot.lane.b32.xlu0 %v62, 122
  %v197 = vpop.permute.xlu0 %196
  %198 = vrot.lane.b32.xlu0 %v63, 122
  %v199 = vpop.permute.xlu0 %198
  %200 = vrot.lane.b32.xlu0 %v64, 122
  %v201 = vpop.permute.xlu0 %200
  %202 = vrot.lane.b32.xlu0 %v65, 122
  %v203 = vpop.permute.xlu0 %202
  %204 = vrot.lane.b32.xlu0 %v66, 122
  %v205 = vpop.permute.xlu0 %204
  %206 = vrot.lane.b32.xlu0 %v67, 122
  %v207 = vpop.permute.xlu0 %206
  %208 = vrot.lane.b32.xlu0 %v68, 122
  %v209 = vpop.permute.xlu0 %208
  %210 = vrot.lane.b32.xlu0 %v69, 122
  %v211 = vpop.permute.xlu0 %210
  %212 = vrot.lane.b32.xlu0 %v70, 122
  %v213 = vpop.permute.xlu0 %212
  %214 = vrot.lane.b32.xlu0 %v71, 122
  %v215 = vpop.permute.xlu0 %214
  %232 = vrot.lane.b32.xlu0 %v56, 120
  %v233 = vpop.permute.xlu0 %232
  %234 = vrot.lane.b32.xlu0 %v57, 120
  %v235 = vpop.permute.xlu0 %234
  %236 = vrot.lane.b32.xlu0 %v58, 120
  %v237 = vpop.permute.xlu0 %236
  %238 = vrot.lane.b32.xlu0 %v59, 120
  %v239 = vpop.permute.xlu0 %238
  %240 = vrot.lane.b32.xlu0 %v60, 120
  %v241 = vpop.permute.xlu0 %240
  %242 = vrot.lane.b32.xlu0 %v61, 120
  %v243 = vpop.permute.xlu0 %242
  %244 = vrot.lane.b32.xlu0 %v62, 120
  %v245 = vpop.permute.xlu0 %244
  %246 = vrot.lane.b32.xlu0 %v63, 120
  %v247 = vpop.permute.xlu0 %246
  %248 = vrot.lane.b32.xlu0 %v64, 120
  %v249 = vpop.permute.xlu0 %248
  %250 = vrot.lane.b32.xlu0 %v65, 120
  %v251 = vpop.permute.xlu0 %250
  %252 = vrot.lane.b32.xlu0 %v66, 120
  %v253 = vpop.permute.xlu0 %252
  %254 = vrot.lane.b32.xlu0 %v67, 120
  %v255 = vpop.permute.xlu0 %254
  %256 = vrot.lane.b32.xlu0 %v68, 120
  %v257 = vpop.permute.xlu0 %256
  %258 = vrot.lane.b32.xlu0 %v69, 120
  %v259 = vpop.permute.xlu0 %258
  %260 = vrot.lane.b32.xlu0 %v70, 120
  %v261 = vpop.permute.xlu0 %260
  %262 = vrot.lane.b32.xlu0 %v71, 120
  %v263 = vpop.permute.xlu0 %262
  %280 = vrot.lane.b32.xlu0 %v56, 118
  %v281 = vpop.permute.xlu0 %280
  %282 = vrot.lane.b32.xlu0 %v57, 118
  %v283 = vpop.permute.xlu0 %282
  %284 = vrot.lane.b32.xlu0 %v58, 118
  %v285 = vpop.permute.xlu0 %284
  %286 = vrot.lane.b32.xlu0 %v59, 118
  %v287 = vpop.permute.xlu0 %286
  %288 = vrot.lane.b32.xlu0 %v60, 118
  %v289 = vpop.permute.xlu0 %288
  %290 = vrot.lane.b32.xlu0 %v61, 118
  %v291 = vpop.permute.xlu0 %290
  %292 = vrot.lane.b32.xlu0 %v62, 118
  %v293 = vpop.permute.xlu0 %292
  %294 = vrot.lane.b32.xlu0 %v63, 118
  %v295 = vpop.permute.xlu0 %294
  %296 = vrot.lane.b32.xlu0 %v64, 118
  %v297 = vpop.permute.xlu0 %296
  %298 = vrot.lane.b32.xlu0 %v65, 118
  %v299 = vpop.permute.xlu0 %298
  %300 = vrot.lane.b32.xlu0 %v66, 118
  %v301 = vpop.permute.xlu0 %300
  %302 = vrot.lane.b32.xlu0 %v67, 118
  %v303 = vpop.permute.xlu0 %302
  %304 = vrot.lane.b32.xlu0 %v68, 118
  %v305 = vpop.permute.xlu0 %304
  %306 = vrot.lane.b32.xlu0 %v69, 118
  %v307 = vpop.permute.xlu0 %306
  %308 = vrot.lane.b32.xlu0 %v70, 118
  %v309 = vpop.permute.xlu0 %308
  %310 = vrot.lane.b32.xlu0 %v71, 118
  %v311 = vpop.permute.xlu0 %310
  %328 = vrot.lane.b32.xlu0 %v56, 116
  %v329 = vpop.permute.xlu0 %328
  %330 = vrot.lane.b32.xlu0 %v57, 116
  %v331 = vpop.permute.xlu0 %330
  %332 = vrot.lane.b32.xlu0 %v58, 116
  %v333 = vpop.permute.xlu0 %332
  %334 = vrot.lane.b32.xlu0 %v59, 116
  %v335 = vpop.permute.xlu0 %334
  %336 = vrot.lane.b32.xlu0 %v60, 116
  %v337 = vpop.permute.xlu0 %336
  %338 = vrot.lane.b32.xlu0 %v61, 116
  %v339 = vpop.permute.xlu0 %338
  %340 = vrot.lane.b32.xlu0 %v62, 116
  %v341 = vpop.permute.xlu0 %340
  %342 = vrot.lane.b32.xlu0 %v63, 116
  %v343 = vpop.permute.xlu0 %342
  %344 = vrot.lane.b32.xlu0 %v64, 116
  %v345 = vpop.permute.xlu0 %344
  %346 = vrot.lane.b32.xlu0 %v65, 116
  %v347 = vpop.permute.xlu0 %346
  %348 = vrot.lane.b32.xlu0 %v66, 116
  %v349 = vpop.permute.xlu0 %348
  %350 = vrot.lane.b32.xlu0 %v67, 116
  %v351 = vpop.permute.xlu0 %350
  %352 = vrot.lane.b32.xlu0 %v68, 116
  %v353 = vpop.permute.xlu0 %352
  %354 = vrot.lane.b32.xlu0 %v69, 116
  %v355 = vpop.permute.xlu0 %354
  %356 = vrot.lane.b32.xlu0 %v70, 116
  %v357 = vpop.permute.xlu0 %356
  %358 = vrot.lane.b32.xlu0 %v71, 116
  %v359 = vpop.permute.xlu0 %358
  %376 = vrot.lane.b32.xlu0 %v56, 114
  %v377 = vpop.permute.xlu0 %376
  %378 = vrot.lane.b32.xlu0 %v57, 114
  %v379 = vpop.permute.xlu0 %378
  %380 = vrot.lane.b32.xlu0 %v58, 114
  %v381 = vpop.permute.xlu0 %380
  %382 = vrot.lane.b32.xlu0 %v59, 114
  %v383 = vpop.permute.xlu0 %382
  %384 = vrot.lane.b32.xlu0 %v60, 114
  %v385 = vpop.permute.xlu0 %384
  %386 = vrot.lane.b32.xlu0 %v61, 114
  %v387 = vpop.permute.xlu0 %386
  %388 = vrot.lane.b32.xlu0 %v62, 114
  %v389 = vpop.permute.xlu0 %388
  %390 = vrot.lane.b32.xlu0 %v63, 114
  %v391 = vpop.permute.xlu0 %390
  %392 = vrot.lane.b32.xlu0 %v64, 114
  %v393 = vpop.permute.xlu0 %392
  %394 = vrot.lane.b32.xlu0 %v65, 114
  %v395 = vpop.permute.xlu0 %394
  %396 = vrot.lane.b32.xlu0 %v66, 114
  %v397 = vpop.permute.xlu0 %396
  %398 = vrot.lane.b32.xlu0 %v67, 114
  %v399 = vpop.permute.xlu0 %398
  %400 = vrot.lane.b32.xlu0 %v68, 114
  %v401 = vpop.permute.xlu0 %400
  %402 = vrot.lane.b32.xlu0 %v69, 114
  %v403 = vpop.permute.xlu0 %402
  %404 = vrot.lane.b32.xlu0 %v70, 114
  %v405 = vpop.permute.xlu0 %404
  %406 = vrot.lane.b32.xlu0 %v71, 114
  %v407 = vpop.permute.xlu0 %406
  %v424 = vrot.slane %v137, 4
  %vm425 = vcmask 1047556
  %v426 = vsel %vm425, %v424, %v56
  %v427 = vrot.slane %v56, 4
  %v428 = vsel %vm425, %v137, %v427
  %v430 = vunpack.c.l.s4 1983009808
  %v431 = vunpack.c.0.s8 %v430
  %v432 = vperm.slane %v426, %v431
  %v434 = vunpack.c.l.s4 1983009808
  %v435 = vunpack.c.0.s8 %v434
  %v436 = vperm.slane %v428, %v435
  %v437 = vrot.slane %v185, 4
  %v438 = vsel %vm425, %v437, %v89
  %v439 = vrot.slane %v89, 4
  %v440 = vsel %vm425, %v185, %v439
  %v442 = vunpack.c.l.s4 1983009808
  %v443 = vunpack.c.0.s8 %v442
  %v444 = vperm.slane %v438, %v443
  %v446 = vunpack.c.l.s4 1983009808
  %v447 = vunpack.c.0.s8 %v446
  %v448 = vperm.slane %v440, %v447
  %v449 = vrot.slane %v329, 4
  %v450 = vsel %vm425, %v449, %v233
  %v451 = vrot.slane %v233, 4
  %v452 = vsel %vm425, %v329, %v451
  %v454 = vunpack.c.l.s4 1983009808
  %v455 = vunpack.c.0.s8 %v454
  %v456 = vperm.slane %v450, %v455
  %v458 = vunpack.c.l.s4 1983009808
  %v459 = vunpack.c.0.s8 %v458
  %v460 = vperm.slane %v452, %v459
  %v461 = vrot.slane %v377, 4
  %v462 = vsel %vm425, %v461, %v281
  %v463 = vrot.slane %v281, 4
  %v464 = vsel %vm425, %v377, %v463
  %v466 = vunpack.c.l.s4 1983009808
  %v467 = vunpack.c.0.s8 %v466
  %v468 = vperm.slane %v462, %v467
  %v470 = vunpack.c.l.s4 1983009808
  %v471 = vunpack.c.0.s8 %v470
  %v472 = vperm.slane %v464, %v471
  %v473 = vrot.slane %v444, 4
  %v474 = vsel %vm425, %v473, %v432
  %v475 = vrot.slane %v432, 4
  %v476 = vsel %vm425, %v444, %v475
  %v478 = vunpack.c.l.s4 1934713408
  %v479 = vunpack.c.0.s8 %v478
  %v480 = vperm.slane %v474, %v479
  %v482 = vunpack.c.l.s4 1934713408
  %v483 = vunpack.c.0.s8 %v482
  %v484 = vperm.slane %v476, %v483
  %v485 = vrot.slane %v448, 4
  %v486 = vsel %vm425, %v485, %v436
  %v487 = vrot.slane %v436, 4
  %v488 = vsel %vm425, %v448, %v487
  %v490 = vunpack.c.l.s4 1934713408
  %v491 = vunpack.c.0.s8 %v490
  %v492 = vperm.slane %v486, %v491
  %v494 = vunpack.c.l.s4 1934713408
  %v495 = vunpack.c.0.s8 %v494
  %v496 = vperm.slane %v488, %v495
  %v497 = vrot.slane %v468, 4
  %v498 = vsel %vm425, %v497, %v456
  %v499 = vrot.slane %v456, 4
  %v500 = vsel %vm425, %v468, %v499
  %v502 = vunpack.c.l.s4 1934713408
  %v503 = vunpack.c.0.s8 %v502
  %v504 = vperm.slane %v498, %v503
  %v506 = vunpack.c.l.s4 1934713408
  %v507 = vunpack.c.0.s8 %v506
  %v508 = vperm.slane %v500, %v507
  %v509 = vrot.slane %v472, 4
  %v510 = vsel %vm425, %v509, %v460
  %v511 = vrot.slane %v460, 4
  %v512 = vsel %vm425, %v472, %v511
  %v514 = vunpack.c.l.s4 1934713408
  %v515 = vunpack.c.0.s8 %v514
  %v516 = vperm.slane %v510, %v515
  %v518 = vunpack.c.l.s4 1934713408
  %v519 = vunpack.c.0.s8 %v518
  %v520 = vperm.slane %v512, %v519
  %v521 = vrot.slane %v504, 4
  %v522 = vsel %vm425, %v521, %v480
  %v523 = vrot.slane %v480, 4
  %v524 = vsel %vm425, %v504, %v523
  %v525 = vrot.slane %v508, 4
  %v526 = vsel %vm425, %v525, %v484
  %v527 = vrot.slane %v484, 4
  %v528 = vsel %vm425, %v508, %v527
  %v529 = vrot.slane %v516, 4
  %v530 = vsel %vm425, %v529, %v492
  %v531 = vrot.slane %v492, 4
  %v532 = vsel %vm425, %v516, %v531
  %v533 = vrot.slane %v520, 4
  %v534 = vsel %vm425, %v533, %v496
  %v535 = vrot.slane %v496, 4
  %v536 = vsel %vm425, %v520, %v535
  %v537 = vrot.slane %v139, 4
  %v538 = vsel %vm425, %v537, %v57
  %v539 = vrot.slane %v57, 4
  %v540 = vsel %vm425, %v139, %v539
  %v542 = vunpack.c.l.s4 1983009808
  %v543 = vunpack.c.0.s8 %v542
  %v544 = vperm.slane %v538, %v543
  %v546 = vunpack.c.l.s4 1983009808
  %v547 = vunpack.c.0.s8 %v546
  %v548 = vperm.slane %v540, %v547
  %v549 = vrot.slane %v187, 4
  %v550 = vsel %vm425, %v549, %v91
  %v551 = vrot.slane %v91, 4
  %v552 = vsel %vm425, %v187, %v551
  %v554 = vunpack.c.l.s4 1983009808
  %v555 = vunpack.c.0.s8 %v554
  %v556 = vperm.slane %v550, %v555
  %v558 = vunpack.c.l.s4 1983009808
  %v559 = vunpack.c.0.s8 %v558
  %v560 = vperm.slane %v552, %v559
  %v561 = vrot.slane %v331, 4
  %v562 = vsel %vm425, %v561, %v235
  %v563 = vrot.slane %v235, 4
  %v564 = vsel %vm425, %v331, %v563
  %v566 = vunpack.c.l.s4 1983009808
  %v567 = vunpack.c.0.s8 %v566
  %v568 = vperm.slane %v562, %v567
  %v570 = vunpack.c.l.s4 1983009808
  %v571 = vunpack.c.0.s8 %v570
  %v572 = vperm.slane %v564, %v571
  %v573 = vrot.slane %v379, 4
  %v574 = vsel %vm425, %v573, %v283
  %v575 = vrot.slane %v283, 4
  %v576 = vsel %vm425, %v379, %v575
  %v578 = vunpack.c.l.s4 1983009808
  %v579 = vunpack.c.0.s8 %v578
  %v580 = vperm.slane %v574, %v579
  %v582 = vunpack.c.l.s4 1983009808
  %v583 = vunpack.c.0.s8 %v582
  %v584 = vperm.slane %v576, %v583
  %v585 = vrot.slane %v556, 4
  %v586 = vsel %vm425, %v585, %v544
  %v587 = vrot.slane %v544, 4
  %v588 = vsel %vm425, %v556, %v587
  %v590 = vunpack.c.l.s4 1934713408
  %v591 = vunpack.c.0.s8 %v590
  %v592 = vperm.slane %v586, %v591
  %v594 = vunpack.c.l.s4 1934713408
  %v595 = vunpack.c.0.s8 %v594
  %v596 = vperm.slane %v588, %v595
  %v597 = vrot.slane %v560, 4
  %v598 = vsel %vm425, %v597, %v548
  %v599 = vrot.slane %v548, 4
  %v600 = vsel %vm425, %v560, %v599
  %v602 = vunpack.c.l.s4 1934713408
  %v603 = vunpack.c.0.s8 %v602
  %v604 = vperm.slane %v598, %v603
  %v606 = vunpack.c.l.s4 1934713408
  %v607 = vunpack.c.0.s8 %v606
  %v608 = vperm.slane %v600, %v607
  %v609 = vrot.slane %v580, 4
  %v610 = vsel %vm425, %v609, %v568
  %v611 = vrot.slane %v568, 4
  %v612 = vsel %vm425, %v580, %v611
  %v614 = vunpack.c.l.s4 1934713408
  %v615 = vunpack.c.0.s8 %v614
  %v616 = vperm.slane %v610, %v615
  %v618 = vunpack.c.l.s4 1934713408
  %v619 = vunpack.c.0.s8 %v618
  %v620 = vperm.slane %v612, %v619
  %v621 = vrot.slane %v584, 4
  %v622 = vsel %vm425, %v621, %v572
  %v623 = vrot.slane %v572, 4
  %v624 = vsel %vm425, %v584, %v623
  %v626 = vunpack.c.l.s4 1934713408
  %v627 = vunpack.c.0.s8 %v626
  %v628 = vperm.slane %v622, %v627
  %v630 = vunpack.c.l.s4 1934713408
  %v631 = vunpack.c.0.s8 %v630
  %v632 = vperm.slane %v624, %v631
  %v633 = vrot.slane %v616, 4
  %v634 = vsel %vm425, %v633, %v592
  %v635 = vrot.slane %v592, 4
  %v636 = vsel %vm425, %v616, %v635
  %v637 = vrot.slane %v620, 4
  %v638 = vsel %vm425, %v637, %v596
  %v639 = vrot.slane %v596, 4
  %v640 = vsel %vm425, %v620, %v639
  %v641 = vrot.slane %v628, 4
  %v642 = vsel %vm425, %v641, %v604
  %v643 = vrot.slane %v604, 4
  %v644 = vsel %vm425, %v628, %v643
  %v645 = vrot.slane %v632, 4
  %v646 = vsel %vm425, %v645, %v608
  %v647 = vrot.slane %v608, 4
  %v648 = vsel %vm425, %v632, %v647
  %v649 = vrot.slane %v141, 4
  %v650 = vsel %vm425, %v649, %v58
  %v651 = vrot.slane %v58, 4
  %v652 = vsel %vm425, %v141, %v651
  %v654 = vunpack.c.l.s4 1983009808
  %v655 = vunpack.c.0.s8 %v654
  %v656 = vperm.slane %v650, %v655
  %v658 = vunpack.c.l.s4 1983009808
  %v659 = vunpack.c.0.s8 %v658
  %v660 = vperm.slane %v652, %v659
  %v661 = vrot.slane %v189, 4
  %v662 = vsel %vm425, %v661, %v93
  %v663 = vrot.slane %v93, 4
  %v664 = vsel %vm425, %v189, %v663
  %v666 = vunpack.c.l.s4 1983009808
  %v667 = vunpack.c.0.s8 %v666
  %v668 = vperm.slane %v662, %v667
  %v670 = vunpack.c.l.s4 1983009808
  %v671 = vunpack.c.0.s8 %v670
  %v672 = vperm.slane %v664, %v671
  %v673 = vrot.slane %v333, 4
  %v674 = vsel %vm425, %v673, %v237
  %v675 = vrot.slane %v237, 4
  %v676 = vsel %vm425, %v333, %v675
  %v678 = vunpack.c.l.s4 1983009808
  %v679 = vunpack.c.0.s8 %v678
  %v680 = vperm.slane %v674, %v679
  %v682 = vunpack.c.l.s4 1983009808
  %v683 = vunpack.c.0.s8 %v682
  %v684 = vperm.slane %v676, %v683
  %v685 = vrot.slane %v381, 4
  %v686 = vsel %vm425, %v685, %v285
  %v687 = vrot.slane %v285, 4
  %v688 = vsel %vm425, %v381, %v687
  %v690 = vunpack.c.l.s4 1983009808
  %v691 = vunpack.c.0.s8 %v690
  %v692 = vperm.slane %v686, %v691
  %v694 = vunpack.c.l.s4 1983009808
  %v695 = vunpack.c.0.s8 %v694
  %v696 = vperm.slane %v688, %v695
  %v697 = vrot.slane %v668, 4
  %v698 = vsel %vm425, %v697, %v656
  %v699 = vrot.slane %v656, 4
  %v700 = vsel %vm425, %v668, %v699
  %v702 = vunpack.c.l.s4 1934713408
  %v703 = vunpack.c.0.s8 %v702
  %v704 = vperm.slane %v698, %v703
  %v706 = vunpack.c.l.s4 1934713408
  %v707 = vunpack.c.0.s8 %v706
  %v708 = vperm.slane %v700, %v707
  %v709 = vrot.slane %v672, 4
  %v710 = vsel %vm425, %v709, %v660
  %v711 = vrot.slane %v660, 4
  %v712 = vsel %vm425, %v672, %v711
  %v714 = vunpack.c.l.s4 1934713408
  %v715 = vunpack.c.0.s8 %v714
  %v716 = vperm.slane %v710, %v715
  %v718 = vunpack.c.l.s4 1934713408
  %v719 = vunpack.c.0.s8 %v718
  %v720 = vperm.slane %v712, %v719
  %v721 = vrot.slane %v692, 4
  %v722 = vsel %vm425, %v721, %v680
  %v723 = vrot.slane %v680, 4
  %v724 = vsel %vm425, %v692, %v723
  %v726 = vunpack.c.l.s4 1934713408
  %v727 = vunpack.c.0.s8 %v726
  %v728 = vperm.slane %v722, %v727
  %v730 = vunpack.c.l.s4 1934713408
  %v731 = vunpack.c.0.s8 %v730
  %v732 = vperm.slane %v724, %v731
  %v733 = vrot.slane %v696, 4
  %v734 = vsel %vm425, %v733, %v684
  %v735 = vrot.slane %v684, 4
  %v736 = vsel %vm425, %v696, %v735
  %v738 = vunpack.c.l.s4 1934713408
  %v739 = vunpack.c.0.s8 %v738
  %v740 = vperm.slane %v734, %v739
  %v742 = vunpack.c.l.s4 1934713408
  %v743 = vunpack.c.0.s8 %v742
  %v744 = vperm.slane %v736, %v743
  %v745 = vrot.slane %v728, 4
  %v746 = vsel %vm425, %v745, %v704
  %v747 = vrot.slane %v704, 4
  %v748 = vsel %vm425, %v728, %v747
  %v749 = vrot.slane %v732, 4
  %v750 = vsel %vm425, %v749, %v708
  %v751 = vrot.slane %v708, 4
  %v752 = vsel %vm425, %v732, %v751
  %v753 = vrot.slane %v740, 4
  %v754 = vsel %vm425, %v753, %v716
  %v755 = vrot.slane %v716, 4
  %v756 = vsel %vm425, %v740, %v755
  %v757 = vrot.slane %v744, 4
  %v758 = vsel %vm425, %v757, %v720
  %v759 = vrot.slane %v720, 4
  %v760 = vsel %vm425, %v744, %v759
  %v761 = vrot.slane %v143, 4
  %v762 = vsel %vm425, %v761, %v59
  %v763 = vrot.slane %v59, 4
  %v764 = vsel %vm425, %v143, %v763
  %v766 = vunpack.c.l.s4 1983009808
  %v767 = vunpack.c.0.s8 %v766
  %v768 = vperm.slane %v762, %v767
  %v770 = vunpack.c.l.s4 1983009808
  %v771 = vunpack.c.0.s8 %v770
  %v772 = vperm.slane %v764, %v771
  %v773 = vrot.slane %v191, 4
  %v774 = vsel %vm425, %v773, %v95
  %v775 = vrot.slane %v95, 4
  %v776 = vsel %vm425, %v191, %v775
  %v778 = vunpack.c.l.s4 1983009808
  %v779 = vunpack.c.0.s8 %v778
  %v780 = vperm.slane %v774, %v779
  %v782 = vunpack.c.l.s4 1983009808
  %v783 = vunpack.c.0.s8 %v782
  %v784 = vperm.slane %v776, %v783
  %v785 = vrot.slane %v335, 4
  %v786 = vsel %vm425, %v785, %v239
  %v787 = vrot.slane %v239, 4
  %v788 = vsel %vm425, %v335, %v787
  %v790 = vunpack.c.l.s4 1983009808
  %v791 = vunpack.c.0.s8 %v790
  %v792 = vperm.slane %v786, %v791
  %v794 = vunpack.c.l.s4 1983009808
  %v795 = vunpack.c.0.s8 %v794
  %v796 = vperm.slane %v788, %v795
  %v797 = vrot.slane %v383, 4
  %v798 = vsel %vm425, %v797, %v287
  %v799 = vrot.slane %v287, 4
  %v800 = vsel %vm425, %v383, %v799
  %v802 = vunpack.c.l.s4 1983009808
  %v803 = vunpack.c.0.s8 %v802
  %v804 = vperm.slane %v798, %v803
  %v806 = vunpack.c.l.s4 1983009808
  %v807 = vunpack.c.0.s8 %v806
  %v808 = vperm.slane %v800, %v807
  %v809 = vrot.slane %v780, 4
  %v810 = vsel %vm425, %v809, %v768
  %v811 = vrot.slane %v768, 4
  %v812 = vsel %vm425, %v780, %v811
  %v814 = vunpack.c.l.s4 1934713408
  %v815 = vunpack.c.0.s8 %v814
  %v816 = vperm.slane %v810, %v815
  %v818 = vunpack.c.l.s4 1934713408
  %v819 = vunpack.c.0.s8 %v818
  %v820 = vperm.slane %v812, %v819
  %v821 = vrot.slane %v784, 4
  %v822 = vsel %vm425, %v821, %v772
  %v823 = vrot.slane %v772, 4
  %v824 = vsel %vm425, %v784, %v823
  %v826 = vunpack.c.l.s4 1934713408
  %v827 = vunpack.c.0.s8 %v826
  %v828 = vperm.slane %v822, %v827
  %v830 = vunpack.c.l.s4 1934713408
  %v831 = vunpack.c.0.s8 %v830
  %v832 = vperm.slane %v824, %v831
  %v833 = vrot.slane %v804, 4
  %v834 = vsel %vm425, %v833, %v792
  %v835 = vrot.slane %v792, 4
  %v836 = vsel %vm425, %v804, %v835
  %v838 = vunpack.c.l.s4 1934713408
  %v839 = vunpack.c.0.s8 %v838
  %v840 = vperm.slane %v834, %v839
  %v842 = vunpack.c.l.s4 1934713408
  %v843 = vunpack.c.0.s8 %v842
  %v844 = vperm.slane %v836, %v843
  %v845 = vrot.slane %v808, 4
  %v846 = vsel %vm425, %v845, %v796
  %v847 = vrot.slane %v796, 4
  %v848 = vsel %vm425, %v808, %v847
  %v850 = vunpack.c.l.s4 1934713408
  %v851 = vunpack.c.0.s8 %v850
  %v852 = vperm.slane %v846, %v851
  %v854 = vunpack.c.l.s4 1934713408
  %v855 = vunpack.c.0.s8 %v854
  %v856 = vperm.slane %v848, %v855
  %v857 = vrot.slane %v840, 4
  %v858 = vsel %vm425, %v857, %v816
  %v859 = vrot.slane %v816, 4
  %v860 = vsel %vm425, %v840, %v859
  %v861 = vrot.slane %v844, 4
  %v862 = vsel %vm425, %v861, %v820
  %v863 = vrot.slane %v820, 4
  %v864 = vsel %vm425, %v844, %v863
  %v865 = vrot.slane %v852, 4
  %v866 = vsel %vm425, %v865, %v828
  %v867 = vrot.slane %v828, 4
  %v868 = vsel %vm425, %v852, %v867
  %v869 = vrot.slane %v856, 4
  %v870 = vsel %vm425, %v869, %v832
  %v871 = vrot.slane %v832, 4
  %v872 = vsel %vm425, %v856, %v871
  %v873 = vrot.slane %v145, 4
  %v874 = vsel %vm425, %v873, %v60
  %v875 = vrot.slane %v60, 4
  %v876 = vsel %vm425, %v145, %v875
  %v878 = vunpack.c.l.s4 1983009808
  %v879 = vunpack.c.0.s8 %v878
  %v880 = vperm.slane %v874, %v879
  %v882 = vunpack.c.l.s4 1983009808
  %v883 = vunpack.c.0.s8 %v882
  %v884 = vperm.slane %v876, %v883
  %v885 = vrot.slane %v193, 4
  %v886 = vsel %vm425, %v885, %v97
  %v887 = vrot.slane %v97, 4
  %v888 = vsel %vm425, %v193, %v887
  %v890 = vunpack.c.l.s4 1983009808
  %v891 = vunpack.c.0.s8 %v890
  %v892 = vperm.slane %v886, %v891
  %v894 = vunpack.c.l.s4 1983009808
  %v895 = vunpack.c.0.s8 %v894
  %v896 = vperm.slane %v888, %v895
  %v897 = vrot.slane %v337, 4
  %v898 = vsel %vm425, %v897, %v241
  %v899 = vrot.slane %v241, 4
  %v900 = vsel %vm425, %v337, %v899
  %v902 = vunpack.c.l.s4 1983009808
  %v903 = vunpack.c.0.s8 %v902
  %v904 = vperm.slane %v898, %v903
  %v906 = vunpack.c.l.s4 1983009808
  %v907 = vunpack.c.0.s8 %v906
  %v908 = vperm.slane %v900, %v907
  %v909 = vrot.slane %v385, 4
  %v910 = vsel %vm425, %v909, %v289
  %v911 = vrot.slane %v289, 4
  %v912 = vsel %vm425, %v385, %v911
  %v914 = vunpack.c.l.s4 1983009808
  %v915 = vunpack.c.0.s8 %v914
  %v916 = vperm.slane %v910, %v915
  %v918 = vunpack.c.l.s4 1983009808
  %v919 = vunpack.c.0.s8 %v918
  %v920 = vperm.slane %v912, %v919
  %v921 = vrot.slane %v892, 4
  %v922 = vsel %vm425, %v921, %v880
  %v923 = vrot.slane %v880, 4
  %v924 = vsel %vm425, %v892, %v923
  %v926 = vunpack.c.l.s4 1934713408
  %v927 = vunpack.c.0.s8 %v926
  %v928 = vperm.slane %v922, %v927
  %v930 = vunpack.c.l.s4 1934713408
  %v931 = vunpack.c.0.s8 %v930
  %v932 = vperm.slane %v924, %v931
  %v933 = vrot.slane %v896, 4
  %v934 = vsel %vm425, %v933, %v884
  %v935 = vrot.slane %v884, 4
  %v936 = vsel %vm425, %v896, %v935
  %v938 = vunpack.c.l.s4 1934713408
  %v939 = vunpack.c.0.s8 %v938
  %v940 = vperm.slane %v934, %v939
  %v942 = vunpack.c.l.s4 1934713408
  %v943 = vunpack.c.0.s8 %v942
  %v944 = vperm.slane %v936, %v943
  %v945 = vrot.slane %v916, 4
  %v946 = vsel %vm425, %v945, %v904
  %v947 = vrot.slane %v904, 4
  %v948 = vsel %vm425, %v916, %v947
  %v950 = vunpack.c.l.s4 1934713408
  %v951 = vunpack.c.0.s8 %v950
  %v952 = vperm.slane %v946, %v951
  %v954 = vunpack.c.l.s4 1934713408
  %v955 = vunpack.c.0.s8 %v954
  %v956 = vperm.slane %v948, %v955
  %v957 = vrot.slane %v920, 4
  %v958 = vsel %vm425, %v957, %v908
  %v959 = vrot.slane %v908, 4
  %v960 = vsel %vm425, %v920, %v959
  %v962 = vunpack.c.l.s4 1934713408
  %v963 = vunpack.c.0.s8 %v962
  %v964 = vperm.slane %v958, %v963
  %v966 = vunpack.c.l.s4 1934713408
  %v967 = vunpack.c.0.s8 %v966
  %v968 = vperm.slane %v960, %v967
  %v969 = vrot.slane %v952, 4
  %v970 = vsel %vm425, %v969, %v928
  %v971 = vrot.slane %v928, 4
  %v972 = vsel %vm425, %v952, %v971
  %v973 = vrot.slane %v956, 4
  %v974 = vsel %vm425, %v973, %v932
  %v975 = vrot.slane %v932, 4
  %v976 = vsel %vm425, %v956, %v975
  %v977 = vrot.slane %v964, 4
  %v978 = vsel %vm425, %v977, %v940
  %v979 = vrot.slane %v940, 4
  %v980 = vsel %vm425, %v964, %v979
  %v981 = vrot.slane %v968, 4
  %v982 = vsel %vm425, %v981, %v944
  %v983 = vrot.slane %v944, 4
  %v984 = vsel %vm425, %v968, %v983
  %v985 = vrot.slane %v147, 4
  %v986 = vsel %vm425, %v985, %v61
  %v987 = vrot.slane %v61, 4
  %v988 = vsel %vm425, %v147, %v987
  %v990 = vunpack.c.l.s4 1983009808
  %v991 = vunpack.c.0.s8 %v990
  %v992 = vperm.slane %v986, %v991
  %v994 = vunpack.c.l.s4 1983009808
  %v995 = vunpack.c.0.s8 %v994
  %v996 = vperm.slane %v988, %v995
  %v997 = vrot.slane %v195, 4
  %v998 = vsel %vm425, %v997, %v99
  %v999 = vrot.slane %v99, 4
  %v1000 = vsel %vm425, %v195, %v999
  %v1002 = vunpack.c.l.s4 1983009808
  %v1003 = vunpack.c.0.s8 %v1002
  %v1004 = vperm.slane %v998, %v1003
  %v1006 = vunpack.c.l.s4 1983009808
  %v1007 = vunpack.c.0.s8 %v1006
  %v1008 = vperm.slane %v1000, %v1007
  %v1009 = vrot.slane %v339, 4
  %v1010 = vsel %vm425, %v1009, %v243
  %v1011 = vrot.slane %v243, 4
  %v1012 = vsel %vm425, %v339, %v1011
  %v1014 = vunpack.c.l.s4 1983009808
  %v1015 = vunpack.c.0.s8 %v1014
  %v1016 = vperm.slane %v1010, %v1015
  %v1018 = vunpack.c.l.s4 1983009808
  %v1019 = vunpack.c.0.s8 %v1018
  %v1020 = vperm.slane %v1012, %v1019
  %v1021 = vrot.slane %v387, 4
  %v1022 = vsel %vm425, %v1021, %v291
  %v1023 = vrot.slane %v291, 4
  %v1024 = vsel %vm425, %v387, %v1023
  %v1026 = vunpack.c.l.s4 1983009808
  %v1027 = vunpack.c.0.s8 %v1026
  %v1028 = vperm.slane %v1022, %v1027
  %v1030 = vunpack.c.l.s4 1983009808
  %v1031 = vunpack.c.0.s8 %v1030
  %v1032 = vperm.slane %v1024, %v1031
  %v1033 = vrot.slane %v1004, 4
  %v1034 = vsel %vm425, %v1033, %v992
  %v1035 = vrot.slane %v992, 4
  %v1036 = vsel %vm425, %v1004, %v1035
  %v1038 = vunpack.c.l.s4 1934713408
  %v1039 = vunpack.c.0.s8 %v1038
  %v1040 = vperm.slane %v1034, %v1039
  %v1042 = vunpack.c.l.s4 1934713408
  %v1043 = vunpack.c.0.s8 %v1042
  %v1044 = vperm.slane %v1036, %v1043
  %v1045 = vrot.slane %v1008, 4
  %v1046 = vsel %vm425, %v1045, %v996
  %v1047 = vrot.slane %v996, 4
  %v1048 = vsel %vm425, %v1008, %v1047
  %v1050 = vunpack.c.l.s4 1934713408
  %v1051 = vunpack.c.0.s8 %v1050
  %v1052 = vperm.slane %v1046, %v1051
  %v1054 = vunpack.c.l.s4 1934713408
  %v1055 = vunpack.c.0.s8 %v1054
  %v1056 = vperm.slane %v1048, %v1055
  %v1057 = vrot.slane %v1028, 4
  %v1058 = vsel %vm425, %v1057, %v1016
  %v1059 = vrot.slane %v1016, 4
  %v1060 = vsel %vm425, %v1028, %v1059
  %v1062 = vunpack.c.l.s4 1934713408
  %v1063 = vunpack.c.0.s8 %v1062
  %v1064 = vperm.slane %v1058, %v1063
  %v1066 = vunpack.c.l.s4 1934713408
  %v1067 = vunpack.c.0.s8 %v1066
  %v1068 = vperm.slane %v1060, %v1067
  %v1069 = vrot.slane %v1032, 4
  %v1070 = vsel %vm425, %v1069, %v1020
  %v1071 = vrot.slane %v1020, 4
  %v1072 = vsel %vm425, %v1032, %v1071
  %v1074 = vunpack.c.l.s4 1934713408
  %v1075 = vunpack.c.0.s8 %v1074
  %v1076 = vperm.slane %v1070, %v1075
  %v1078 = vunpack.c.l.s4 1934713408
  %v1079 = vunpack.c.0.s8 %v1078
  %v1080 = vperm.slane %v1072, %v1079
  %v1081 = vrot.slane %v1064, 4
  %v1082 = vsel %vm425, %v1081, %v1040
  %v1083 = vrot.slane %v1040, 4
  %v1084 = vsel %vm425, %v1064, %v1083
  %v1085 = vrot.slane %v1068, 4
  %v1086 = vsel %vm425, %v1085, %v1044
  %v1087 = vrot.slane %v1044, 4
  %v1088 = vsel %vm425, %v1068, %v1087
  %v1089 = vrot.slane %v1076, 4
  %v1090 = vsel %vm425, %v1089, %v1052
  %v1091 = vrot.slane %v1052, 4
  %v1092 = vsel %vm425, %v1076, %v1091
  %v1093 = vrot.slane %v1080, 4
  %v1094 = vsel %vm425, %v1093, %v1056
  %v1095 = vrot.slane %v1056, 4
  %v1096 = vsel %vm425, %v1080, %v1095
  %v1097 = vrot.slane %v149, 4
  %v1098 = vsel %vm425, %v1097, %v62
  %v1099 = vrot.slane %v62, 4
  %v1100 = vsel %vm425, %v149, %v1099
  %v1102 = vunpack.c.l.s4 1983009808
  %v1103 = vunpack.c.0.s8 %v1102
  %v1104 = vperm.slane %v1098, %v1103
  %v1106 = vunpack.c.l.s4 1983009808
  %v1107 = vunpack.c.0.s8 %v1106
  %v1108 = vperm.slane %v1100, %v1107
  %v1109 = vrot.slane %v197, 4
  %v1110 = vsel %vm425, %v1109, %v101
  %v1111 = vrot.slane %v101, 4
  %v1112 = vsel %vm425, %v197, %v1111
  %v1114 = vunpack.c.l.s4 1983009808
  %v1115 = vunpack.c.0.s8 %v1114
  %v1116 = vperm.slane %v1110, %v1115
  %v1118 = vunpack.c.l.s4 1983009808
  %v1119 = vunpack.c.0.s8 %v1118
  %v1120 = vperm.slane %v1112, %v1119
  %v1121 = vrot.slane %v341, 4
  %v1122 = vsel %vm425, %v1121, %v245
  %v1123 = vrot.slane %v245, 4
  %v1124 = vsel %vm425, %v341, %v1123
  %v1126 = vunpack.c.l.s4 1983009808
  %v1127 = vunpack.c.0.s8 %v1126
  %v1128 = vperm.slane %v1122, %v1127
  %v1130 = vunpack.c.l.s4 1983009808
  %v1131 = vunpack.c.0.s8 %v1130
  %v1132 = vperm.slane %v1124, %v1131
  %v1133 = vrot.slane %v389, 4
  %v1134 = vsel %vm425, %v1133, %v293
  %v1135 = vrot.slane %v293, 4
  %v1136 = vsel %vm425, %v389, %v1135
  %v1138 = vunpack.c.l.s4 1983009808
  %v1139 = vunpack.c.0.s8 %v1138
  %v1140 = vperm.slane %v1134, %v1139
  %v1142 = vunpack.c.l.s4 1983009808
  %v1143 = vunpack.c.0.s8 %v1142
  %v1144 = vperm.slane %v1136, %v1143
  %v1145 = vrot.slane %v1116, 4
  %v1146 = vsel %vm425, %v1145, %v1104
  %v1147 = vrot.slane %v1104, 4
  %v1148 = vsel %vm425, %v1116, %v1147
  %v1150 = vunpack.c.l.s4 1934713408
  %v1151 = vunpack.c.0.s8 %v1150
  %v1152 = vperm.slane %v1146, %v1151
  %v1154 = vunpack.c.l.s4 1934713408
  %v1155 = vunpack.c.0.s8 %v1154
  %v1156 = vperm.slane %v1148, %v1155
  %v1157 = vrot.slane %v1120, 4
  %v1158 = vsel %vm425, %v1157, %v1108
  %v1159 = vrot.slane %v1108, 4
  %v1160 = vsel %vm425, %v1120, %v1159
  %v1162 = vunpack.c.l.s4 1934713408
  %v1163 = vunpack.c.0.s8 %v1162
  %v1164 = vperm.slane %v1158, %v1163
  %v1166 = vunpack.c.l.s4 1934713408
  %v1167 = vunpack.c.0.s8 %v1166
  %v1168 = vperm.slane %v1160, %v1167
  %v1169 = vrot.slane %v1140, 4
  %v1170 = vsel %vm425, %v1169, %v1128
  %v1171 = vrot.slane %v1128, 4
  %v1172 = vsel %vm425, %v1140, %v1171
  %v1174 = vunpack.c.l.s4 1934713408
  %v1175 = vunpack.c.0.s8 %v1174
  %v1176 = vperm.slane %v1170, %v1175
  %v1178 = vunpack.c.l.s4 1934713408
  %v1179 = vunpack.c.0.s8 %v1178
  %v1180 = vperm.slane %v1172, %v1179
  %v1181 = vrot.slane %v1144, 4
  %v1182 = vsel %vm425, %v1181, %v1132
  %v1183 = vrot.slane %v1132, 4
  %v1184 = vsel %vm425, %v1144, %v1183
  %v1186 = vunpack.c.l.s4 1934713408
  %v1187 = vunpack.c.0.s8 %v1186
  %v1188 = vperm.slane %v1182, %v1187
  %v1190 = vunpack.c.l.s4 1934713408
  %v1191 = vunpack.c.0.s8 %v1190
  %v1192 = vperm.slane %v1184, %v1191
  %v1193 = vrot.slane %v1176, 4
  %v1194 = vsel %vm425, %v1193, %v1152
  %v1195 = vrot.slane %v1152, 4
  %v1196 = vsel %vm425, %v1176, %v1195
  %v1197 = vrot.slane %v1180, 4
  %v1198 = vsel %vm425, %v1197, %v1156
  %v1199 = vrot.slane %v1156, 4
  %v1200 = vsel %vm425, %v1180, %v1199
  %v1201 = vrot.slane %v1188, 4
  %v1202 = vsel %vm425, %v1201, %v1164
  %v1203 = vrot.slane %v1164, 4
  %v1204 = vsel %vm425, %v1188, %v1203
  %v1205 = vrot.slane %v1192, 4
  %v1206 = vsel %vm425, %v1205, %v1168
  %v1207 = vrot.slane %v1168, 4
  %v1208 = vsel %vm425, %v1192, %v1207
  %v1209 = vrot.slane %v151, 4
  %v1210 = vsel %vm425, %v1209, %v63
  %v1211 = vrot.slane %v63, 4
  %v1212 = vsel %vm425, %v151, %v1211
  %v1214 = vunpack.c.l.s4 1983009808
  %v1215 = vunpack.c.0.s8 %v1214
  %v1216 = vperm.slane %v1210, %v1215
  %v1218 = vunpack.c.l.s4 1983009808
  %v1219 = vunpack.c.0.s8 %v1218
  %v1220 = vperm.slane %v1212, %v1219
  %v1221 = vrot.slane %v199, 4
  %v1222 = vsel %vm425, %v1221, %v103
  %v1223 = vrot.slane %v103, 4
  %v1224 = vsel %vm425, %v199, %v1223
  %v1226 = vunpack.c.l.s4 1983009808
  %v1227 = vunpack.c.0.s8 %v1226
  %v1228 = vperm.slane %v1222, %v1227
  %v1230 = vunpack.c.l.s4 1983009808
  %v1231 = vunpack.c.0.s8 %v1230
  %v1232 = vperm.slane %v1224, %v1231
  %v1233 = vrot.slane %v343, 4
  %v1234 = vsel %vm425, %v1233, %v247
  %v1235 = vrot.slane %v247, 4
  %v1236 = vsel %vm425, %v343, %v1235
  %v1238 = vunpack.c.l.s4 1983009808
  %v1239 = vunpack.c.0.s8 %v1238
  %v1240 = vperm.slane %v1234, %v1239
  %v1242 = vunpack.c.l.s4 1983009808
  %v1243 = vunpack.c.0.s8 %v1242
  %v1244 = vperm.slane %v1236, %v1243
  %v1245 = vrot.slane %v391, 4
  %v1246 = vsel %vm425, %v1245, %v295
  %v1247 = vrot.slane %v295, 4
  %v1248 = vsel %vm425, %v391, %v1247
  %v1250 = vunpack.c.l.s4 1983009808
  %v1251 = vunpack.c.0.s8 %v1250
  %v1252 = vperm.slane %v1246, %v1251
  %v1254 = vunpack.c.l.s4 1983009808
  %v1255 = vunpack.c.0.s8 %v1254
  %v1256 = vperm.slane %v1248, %v1255
  %v1257 = vrot.slane %v1228, 4
  %v1258 = vsel %vm425, %v1257, %v1216
  %v1259 = vrot.slane %v1216, 4
  %v1260 = vsel %vm425, %v1228, %v1259
  %v1262 = vunpack.c.l.s4 1934713408
  %v1263 = vunpack.c.0.s8 %v1262
  %v1264 = vperm.slane %v1258, %v1263
  %v1266 = vunpack.c.l.s4 1934713408
  %v1267 = vunpack.c.0.s8 %v1266
  %v1268 = vperm.slane %v1260, %v1267
  %v1269 = vrot.slane %v1232, 4
  %v1270 = vsel %vm425, %v1269, %v1220
  %v1271 = vrot.slane %v1220, 4
  %v1272 = vsel %vm425, %v1232, %v1271
  %v1274 = vunpack.c.l.s4 1934713408
  %v1275 = vunpack.c.0.s8 %v1274
  %v1276 = vperm.slane %v1270, %v1275
  %v1278 = vunpack.c.l.s4 1934713408
  %v1279 = vunpack.c.0.s8 %v1278
  %v1280 = vperm.slane %v1272, %v1279
  %v1281 = vrot.slane %v1252, 4
  %v1282 = vsel %vm425, %v1281, %v1240
  %v1283 = vrot.slane %v1240, 4
  %v1284 = vsel %vm425, %v1252, %v1283
  %v1286 = vunpack.c.l.s4 1934713408
  %v1287 = vunpack.c.0.s8 %v1286
  %v1288 = vperm.slane %v1282, %v1287
  %v1290 = vunpack.c.l.s4 1934713408
  %v1291 = vunpack.c.0.s8 %v1290
  %v1292 = vperm.slane %v1284, %v1291
  %v1293 = vrot.slane %v1256, 4
  %v1294 = vsel %vm425, %v1293, %v1244
  %v1295 = vrot.slane %v1244, 4
  %v1296 = vsel %vm425, %v1256, %v1295
  %v1298 = vunpack.c.l.s4 1934713408
  %v1299 = vunpack.c.0.s8 %v1298
  %v1300 = vperm.slane %v1294, %v1299
  %v1302 = vunpack.c.l.s4 1934713408
  %v1303 = vunpack.c.0.s8 %v1302
  %v1304 = vperm.slane %v1296, %v1303
  %v1305 = vrot.slane %v1288, 4
  %v1306 = vsel %vm425, %v1305, %v1264
  %v1307 = vrot.slane %v1264, 4
  %v1308 = vsel %vm425, %v1288, %v1307
  %v1309 = vrot.slane %v1292, 4
  %v1310 = vsel %vm425, %v1309, %v1268
  %v1311 = vrot.slane %v1268, 4
  %v1312 = vsel %vm425, %v1292, %v1311
  %v1313 = vrot.slane %v1300, 4
  %v1314 = vsel %vm425, %v1313, %v1276
  %v1315 = vrot.slane %v1276, 4
  %v1316 = vsel %vm425, %v1300, %v1315
  %v1317 = vrot.slane %v1304, 4
  %v1318 = vsel %vm425, %v1317, %v1280
  %v1319 = vrot.slane %v1280, 4
  %v1320 = vsel %vm425, %v1304, %v1319
  %v1321 = vrot.slane %v153, 4
  %v1322 = vsel %vm425, %v1321, %v64
  %v1323 = vrot.slane %v64, 4
  %v1324 = vsel %vm425, %v153, %v1323
  %v1326 = vunpack.c.l.s4 1983009808
  %v1327 = vunpack.c.0.s8 %v1326
  %v1328 = vperm.slane %v1322, %v1327
  %v1330 = vunpack.c.l.s4 1983009808
  %v1331 = vunpack.c.0.s8 %v1330
  %v1332 = vperm.slane %v1324, %v1331
  %v1333 = vrot.slane %v201, 4
  %v1334 = vsel %vm425, %v1333, %v105
  %v1335 = vrot.slane %v105, 4
  %v1336 = vsel %vm425, %v201, %v1335
  %v1338 = vunpack.c.l.s4 1983009808
  %v1339 = vunpack.c.0.s8 %v1338
  %v1340 = vperm.slane %v1334, %v1339
  %v1342 = vunpack.c.l.s4 1983009808
  %v1343 = vunpack.c.0.s8 %v1342
  %v1344 = vperm.slane %v1336, %v1343
  %v1345 = vrot.slane %v345, 4
  %v1346 = vsel %vm425, %v1345, %v249
  %v1347 = vrot.slane %v249, 4
  %v1348 = vsel %vm425, %v345, %v1347
  %v1350 = vunpack.c.l.s4 1983009808
  %v1351 = vunpack.c.0.s8 %v1350
  %v1352 = vperm.slane %v1346, %v1351
  %v1354 = vunpack.c.l.s4 1983009808
  %v1355 = vunpack.c.0.s8 %v1354
  %v1356 = vperm.slane %v1348, %v1355
  %v1357 = vrot.slane %v393, 4
  %v1358 = vsel %vm425, %v1357, %v297
  %v1359 = vrot.slane %v297, 4
  %v1360 = vsel %vm425, %v393, %v1359
  %v1362 = vunpack.c.l.s4 1983009808
  %v1363 = vunpack.c.0.s8 %v1362
  %v1364 = vperm.slane %v1358, %v1363
  %v1366 = vunpack.c.l.s4 1983009808
  %v1367 = vunpack.c.0.s8 %v1366
  %v1368 = vperm.slane %v1360, %v1367
  %v1369 = vrot.slane %v1340, 4
  %v1370 = vsel %vm425, %v1369, %v1328
  %v1371 = vrot.slane %v1328, 4
  %v1372 = vsel %vm425, %v1340, %v1371
  %v1374 = vunpack.c.l.s4 1934713408
  %v1375 = vunpack.c.0.s8 %v1374
  %v1376 = vperm.slane %v1370, %v1375
  %v1378 = vunpack.c.l.s4 1934713408
  %v1379 = vunpack.c.0.s8 %v1378
  %v1380 = vperm.slane %v1372, %v1379
  %v1381 = vrot.slane %v1344, 4
  %v1382 = vsel %vm425, %v1381, %v1332
  %v1383 = vrot.slane %v1332, 4
  %v1384 = vsel %vm425, %v1344, %v1383
  %v1386 = vunpack.c.l.s4 1934713408
  %v1387 = vunpack.c.0.s8 %v1386
  %v1388 = vperm.slane %v1382, %v1387
  %v1390 = vunpack.c.l.s4 1934713408
  %v1391 = vunpack.c.0.s8 %v1390
  %v1392 = vperm.slane %v1384, %v1391
  %v1393 = vrot.slane %v1364, 4
  %v1394 = vsel %vm425, %v1393, %v1352
  %v1395 = vrot.slane %v1352, 4
  %v1396 = vsel %vm425, %v1364, %v1395
  %v1398 = vunpack.c.l.s4 1934713408
  %v1399 = vunpack.c.0.s8 %v1398
  %v1400 = vperm.slane %v1394, %v1399
  %v1402 = vunpack.c.l.s4 1934713408
  %v1403 = vunpack.c.0.s8 %v1402
  %v1404 = vperm.slane %v1396, %v1403
  %v1405 = vrot.slane %v1368, 4
  %v1406 = vsel %vm425, %v1405, %v1356
  %v1407 = vrot.slane %v1356, 4
  %v1408 = vsel %vm425, %v1368, %v1407
  %v1410 = vunpack.c.l.s4 1934713408
  %v1411 = vunpack.c.0.s8 %v1410
  %v1412 = vperm.slane %v1406, %v1411
  %v1414 = vunpack.c.l.s4 1934713408
  %v1415 = vunpack.c.0.s8 %v1414
  %v1416 = vperm.slane %v1408, %v1415
  %v1417 = vrot.slane %v1400, 4
  %v1418 = vsel %vm425, %v1417, %v1376
  %v1419 = vrot.slane %v1376, 4
  %v1420 = vsel %vm425, %v1400, %v1419
  %v1421 = vrot.slane %v1404, 4
  %v1422 = vsel %vm425, %v1421, %v1380
  %v1423 = vrot.slane %v1380, 4
  %v1424 = vsel %vm425, %v1404, %v1423
  %v1425 = vrot.slane %v1412, 4
  %v1426 = vsel %vm425, %v1425, %v1388
  %v1427 = vrot.slane %v1388, 4
  %v1428 = vsel %vm425, %v1412, %v1427
  %v1429 = vrot.slane %v1416, 4
  %v1430 = vsel %vm425, %v1429, %v1392
  %v1431 = vrot.slane %v1392, 4
  %v1432 = vsel %vm425, %v1416, %v1431
  %v1433 = vrot.slane %v155, 4
  %v1434 = vsel %vm425, %v1433, %v65
  %v1435 = vrot.slane %v65, 4
  %v1436 = vsel %vm425, %v155, %v1435
  %v1438 = vunpack.c.l.s4 1983009808
  %v1439 = vunpack.c.0.s8 %v1438
  %v1440 = vperm.slane %v1434, %v1439
  %v1442 = vunpack.c.l.s4 1983009808
  %v1443 = vunpack.c.0.s8 %v1442
  %v1444 = vperm.slane %v1436, %v1443
  %v1445 = vrot.slane %v203, 4
  %v1446 = vsel %vm425, %v1445, %v107
  %v1447 = vrot.slane %v107, 4
  %v1448 = vsel %vm425, %v203, %v1447
  %v1450 = vunpack.c.l.s4 1983009808
  %v1451 = vunpack.c.0.s8 %v1450
  %v1452 = vperm.slane %v1446, %v1451
  %v1454 = vunpack.c.l.s4 1983009808
  %v1455 = vunpack.c.0.s8 %v1454
  %v1456 = vperm.slane %v1448, %v1455
  %v1457 = vrot.slane %v347, 4
  %v1458 = vsel %vm425, %v1457, %v251
  %v1459 = vrot.slane %v251, 4
  %v1460 = vsel %vm425, %v347, %v1459
  %v1462 = vunpack.c.l.s4 1983009808
  %v1463 = vunpack.c.0.s8 %v1462
  %v1464 = vperm.slane %v1458, %v1463
  %v1466 = vunpack.c.l.s4 1983009808
  %v1467 = vunpack.c.0.s8 %v1466
  %v1468 = vperm.slane %v1460, %v1467
  %v1469 = vrot.slane %v395, 4
  %v1470 = vsel %vm425, %v1469, %v299
  %v1471 = vrot.slane %v299, 4
  %v1472 = vsel %vm425, %v395, %v1471
  %v1474 = vunpack.c.l.s4 1983009808
  %v1475 = vunpack.c.0.s8 %v1474
  %v1476 = vperm.slane %v1470, %v1475
  %v1478 = vunpack.c.l.s4 1983009808
  %v1479 = vunpack.c.0.s8 %v1478
  %v1480 = vperm.slane %v1472, %v1479
  %v1481 = vrot.slane %v1452, 4
  %v1482 = vsel %vm425, %v1481, %v1440
  %v1483 = vrot.slane %v1440, 4
  %v1484 = vsel %vm425, %v1452, %v1483
  %v1486 = vunpack.c.l.s4 1934713408
  %v1487 = vunpack.c.0.s8 %v1486
  %v1488 = vperm.slane %v1482, %v1487
  %v1490 = vunpack.c.l.s4 1934713408
  %v1491 = vunpack.c.0.s8 %v1490
  %v1492 = vperm.slane %v1484, %v1491
  %v1493 = vrot.slane %v1456, 4
  %v1494 = vsel %vm425, %v1493, %v1444
  %v1495 = vrot.slane %v1444, 4
  %v1496 = vsel %vm425, %v1456, %v1495
  %v1498 = vunpack.c.l.s4 1934713408
  %v1499 = vunpack.c.0.s8 %v1498
  %v1500 = vperm.slane %v1494, %v1499
  %v1502 = vunpack.c.l.s4 1934713408
  %v1503 = vunpack.c.0.s8 %v1502
  %v1504 = vperm.slane %v1496, %v1503
  %v1505 = vrot.slane %v1476, 4
  %v1506 = vsel %vm425, %v1505, %v1464
  %v1507 = vrot.slane %v1464, 4
  %v1508 = vsel %vm425, %v1476, %v1507
  %v1510 = vunpack.c.l.s4 1934713408
  %v1511 = vunpack.c.0.s8 %v1510
  %v1512 = vperm.slane %v1506, %v1511
  %v1514 = vunpack.c.l.s4 1934713408
  %v1515 = vunpack.c.0.s8 %v1514
  %v1516 = vperm.slane %v1508, %v1515
  %v1517 = vrot.slane %v1480, 4
  %v1518 = vsel %vm425, %v1517, %v1468
  %v1519 = vrot.slane %v1468, 4
  %v1520 = vsel %vm425, %v1480, %v1519
  %v1522 = vunpack.c.l.s4 1934713408
  %v1523 = vunpack.c.0.s8 %v1522
  %v1524 = vperm.slane %v1518, %v1523
  %v1526 = vunpack.c.l.s4 1934713408
  %v1527 = vunpack.c.0.s8 %v1526
  %v1528 = vperm.slane %v1520, %v1527
  %v1529 = vrot.slane %v1512, 4
  %v1530 = vsel %vm425, %v1529, %v1488
  %v1531 = vrot.slane %v1488, 4
  %v1532 = vsel %vm425, %v1512, %v1531
  %v1533 = vrot.slane %v1516, 4
  %v1534 = vsel %vm425, %v1533, %v1492
  %v1535 = vrot.slane %v1492, 4
  %v1536 = vsel %vm425, %v1516, %v1535
  %v1537 = vrot.slane %v1524, 4
  %v1538 = vsel %vm425, %v1537, %v1500
  %v1539 = vrot.slane %v1500, 4
  %v1540 = vsel %vm425, %v1524, %v1539
  %v1541 = vrot.slane %v1528, 4
  %v1542 = vsel %vm425, %v1541, %v1504
  %v1543 = vrot.slane %v1504, 4
  %v1544 = vsel %vm425, %v1528, %v1543
  %v1545 = vrot.slane %v157, 4
  %v1546 = vsel %vm425, %v1545, %v66
  %v1547 = vrot.slane %v66, 4
  %v1548 = vsel %vm425, %v157, %v1547
  %v1550 = vunpack.c.l.s4 1983009808
  %v1551 = vunpack.c.0.s8 %v1550
  %v1552 = vperm.slane %v1546, %v1551
  %v1554 = vunpack.c.l.s4 1983009808
  %v1555 = vunpack.c.0.s8 %v1554
  %v1556 = vperm.slane %v1548, %v1555
  %v1557 = vrot.slane %v205, 4
  %v1558 = vsel %vm425, %v1557, %v109
  %v1559 = vrot.slane %v109, 4
  %v1560 = vsel %vm425, %v205, %v1559
  %v1562 = vunpack.c.l.s4 1983009808
  %v1563 = vunpack.c.0.s8 %v1562
  %v1564 = vperm.slane %v1558, %v1563
  %v1566 = vunpack.c.l.s4 1983009808
  %v1567 = vunpack.c.0.s8 %v1566
  %v1568 = vperm.slane %v1560, %v1567
  %v1569 = vrot.slane %v349, 4
  %v1570 = vsel %vm425, %v1569, %v253
  %v1571 = vrot.slane %v253, 4
  %v1572 = vsel %vm425, %v349, %v1571
  %v1574 = vunpack.c.l.s4 1983009808
  %v1575 = vunpack.c.0.s8 %v1574
  %v1576 = vperm.slane %v1570, %v1575
  %v1578 = vunpack.c.l.s4 1983009808
  %v1579 = vunpack.c.0.s8 %v1578
  %v1580 = vperm.slane %v1572, %v1579
  %v1581 = vrot.slane %v397, 4
  %v1582 = vsel %vm425, %v1581, %v301
  %v1583 = vrot.slane %v301, 4
  %v1584 = vsel %vm425, %v397, %v1583
  %v1586 = vunpack.c.l.s4 1983009808
  %v1587 = vunpack.c.0.s8 %v1586
  %v1588 = vperm.slane %v1582, %v1587
  %v1590 = vunpack.c.l.s4 1983009808
  %v1591 = vunpack.c.0.s8 %v1590
  %v1592 = vperm.slane %v1584, %v1591
  %v1593 = vrot.slane %v1564, 4
  %v1594 = vsel %vm425, %v1593, %v1552
  %v1595 = vrot.slane %v1552, 4
  %v1596 = vsel %vm425, %v1564, %v1595
  %v1598 = vunpack.c.l.s4 1934713408
  %v1599 = vunpack.c.0.s8 %v1598
  %v1600 = vperm.slane %v1594, %v1599
  %v1602 = vunpack.c.l.s4 1934713408
  %v1603 = vunpack.c.0.s8 %v1602
  %v1604 = vperm.slane %v1596, %v1603
  %v1605 = vrot.slane %v1568, 4
  %v1606 = vsel %vm425, %v1605, %v1556
  %v1607 = vrot.slane %v1556, 4
  %v1608 = vsel %vm425, %v1568, %v1607
  %v1610 = vunpack.c.l.s4 1934713408
  %v1611 = vunpack.c.0.s8 %v1610
  %v1612 = vperm.slane %v1606, %v1611
  %v1614 = vunpack.c.l.s4 1934713408
  %v1615 = vunpack.c.0.s8 %v1614
  %v1616 = vperm.slane %v1608, %v1615
  %v1617 = vrot.slane %v1588, 4
  %v1618 = vsel %vm425, %v1617, %v1576
  %v1619 = vrot.slane %v1576, 4
  %v1620 = vsel %vm425, %v1588, %v1619
  %v1622 = vunpack.c.l.s4 1934713408
  %v1623 = vunpack.c.0.s8 %v1622
  %v1624 = vperm.slane %v1618, %v1623
  %v1626 = vunpack.c.l.s4 1934713408
  %v1627 = vunpack.c.0.s8 %v1626
  %v1628 = vperm.slane %v1620, %v1627
  %v1629 = vrot.slane %v1592, 4
  %v1630 = vsel %vm425, %v1629, %v1580
  %v1631 = vrot.slane %v1580, 4
  %v1632 = vsel %vm425, %v1592, %v1631
  %v1634 = vunpack.c.l.s4 1934713408
  %v1635 = vunpack.c.0.s8 %v1634
  %v1636 = vperm.slane %v1630, %v1635
  %v1638 = vunpack.c.l.s4 1934713408
  %v1639 = vunpack.c.0.s8 %v1638
  %v1640 = vperm.slane %v1632, %v1639
  %v1641 = vrot.slane %v1624, 4
  %v1642 = vsel %vm425, %v1641, %v1600
  %v1643 = vrot.slane %v1600, 4
  %v1644 = vsel %vm425, %v1624, %v1643
  %v1645 = vrot.slane %v1628, 4
  %v1646 = vsel %vm425, %v1645, %v1604
  %v1647 = vrot.slane %v1604, 4
  %v1648 = vsel %vm425, %v1628, %v1647
  %v1649 = vrot.slane %v1636, 4
  %v1650 = vsel %vm425, %v1649, %v1612
  %v1651 = vrot.slane %v1612, 4
  %v1652 = vsel %vm425, %v1636, %v1651
  %v1653 = vrot.slane %v1640, 4
  %v1654 = vsel %vm425, %v1653, %v1616
  %v1655 = vrot.slane %v1616, 4
  %v1656 = vsel %vm425, %v1640, %v1655
  %v1657 = vrot.slane %v159, 4
  %v1658 = vsel %vm425, %v1657, %v67
  %v1659 = vrot.slane %v67, 4
  %v1660 = vsel %vm425, %v159, %v1659
  %v1662 = vunpack.c.l.s4 1983009808
  %v1663 = vunpack.c.0.s8 %v1662
  %v1664 = vperm.slane %v1658, %v1663
  %v1666 = vunpack.c.l.s4 1983009808
  %v1667 = vunpack.c.0.s8 %v1666
  %v1668 = vperm.slane %v1660, %v1667
  %v1669 = vrot.slane %v207, 4
  %v1670 = vsel %vm425, %v1669, %v111
  %v1671 = vrot.slane %v111, 4
  %v1672 = vsel %vm425, %v207, %v1671
  %v1674 = vunpack.c.l.s4 1983009808
  %v1675 = vunpack.c.0.s8 %v1674
  %v1676 = vperm.slane %v1670, %v1675
  %v1678 = vunpack.c.l.s4 1983009808
  %v1679 = vunpack.c.0.s8 %v1678
  %v1680 = vperm.slane %v1672, %v1679
  %v1681 = vrot.slane %v351, 4
  %v1682 = vsel %vm425, %v1681, %v255
  %v1683 = vrot.slane %v255, 4
  %v1684 = vsel %vm425, %v351, %v1683
  %v1686 = vunpack.c.l.s4 1983009808
  %v1687 = vunpack.c.0.s8 %v1686
  %v1688 = vperm.slane %v1682, %v1687
  %v1690 = vunpack.c.l.s4 1983009808
  %v1691 = vunpack.c.0.s8 %v1690
  %v1692 = vperm.slane %v1684, %v1691
  %v1693 = vrot.slane %v399, 4
  %v1694 = vsel %vm425, %v1693, %v303
  %v1695 = vrot.slane %v303, 4
  %v1696 = vsel %vm425, %v399, %v1695
  %v1698 = vunpack.c.l.s4 1983009808
  %v1699 = vunpack.c.0.s8 %v1698
  %v1700 = vperm.slane %v1694, %v1699
  %v1702 = vunpack.c.l.s4 1983009808
  %v1703 = vunpack.c.0.s8 %v1702
  %v1704 = vperm.slane %v1696, %v1703
  %v1705 = vrot.slane %v1676, 4
  %v1706 = vsel %vm425, %v1705, %v1664
  %v1707 = vrot.slane %v1664, 4
  %v1708 = vsel %vm425, %v1676, %v1707
  %v1710 = vunpack.c.l.s4 1934713408
  %v1711 = vunpack.c.0.s8 %v1710
  %v1712 = vperm.slane %v1706, %v1711
  %v1714 = vunpack.c.l.s4 1934713408
  %v1715 = vunpack.c.0.s8 %v1714
  %v1716 = vperm.slane %v1708, %v1715
  %v1717 = vrot.slane %v1680, 4
  %v1718 = vsel %vm425, %v1717, %v1668
  %v1719 = vrot.slane %v1668, 4
  %v1720 = vsel %vm425, %v1680, %v1719
  %v1722 = vunpack.c.l.s4 1934713408
  %v1723 = vunpack.c.0.s8 %v1722
  %v1724 = vperm.slane %v1718, %v1723
  %v1726 = vunpack.c.l.s4 1934713408
  %v1727 = vunpack.c.0.s8 %v1726
  %v1728 = vperm.slane %v1720, %v1727
  %v1729 = vrot.slane %v1700, 4
  %v1730 = vsel %vm425, %v1729, %v1688
  %v1731 = vrot.slane %v1688, 4
  %v1732 = vsel %vm425, %v1700, %v1731
  %v1734 = vunpack.c.l.s4 1934713408
  %v1735 = vunpack.c.0.s8 %v1734
  %v1736 = vperm.slane %v1730, %v1735
  %v1738 = vunpack.c.l.s4 1934713408
  %v1739 = vunpack.c.0.s8 %v1738
  %v1740 = vperm.slane %v1732, %v1739
  %v1741 = vrot.slane %v1704, 4
  %v1742 = vsel %vm425, %v1741, %v1692
  %v1743 = vrot.slane %v1692, 4
  %v1744 = vsel %vm425, %v1704, %v1743
  %v1746 = vunpack.c.l.s4 1934713408
  %v1747 = vunpack.c.0.s8 %v1746
  %v1748 = vperm.slane %v1742, %v1747
  %v1750 = vunpack.c.l.s4 1934713408
  %v1751 = vunpack.c.0.s8 %v1750
  %v1752 = vperm.slane %v1744, %v1751
  %v1753 = vrot.slane %v1736, 4
  %v1754 = vsel %vm425, %v1753, %v1712
  %v1755 = vrot.slane %v1712, 4
  %v1756 = vsel %vm425, %v1736, %v1755
  %v1757 = vrot.slane %v1740, 4
  %v1758 = vsel %vm425, %v1757, %v1716
  %v1759 = vrot.slane %v1716, 4
  %v1760 = vsel %vm425, %v1740, %v1759
  %v1761 = vrot.slane %v1748, 4
  %v1762 = vsel %vm425, %v1761, %v1724
  %v1763 = vrot.slane %v1724, 4
  %v1764 = vsel %vm425, %v1748, %v1763
  %v1765 = vrot.slane %v1752, 4
  %v1766 = vsel %vm425, %v1765, %v1728
  %v1767 = vrot.slane %v1728, 4
  %v1768 = vsel %vm425, %v1752, %v1767
  %v1769 = vrot.slane %v161, 4
  %v1770 = vsel %vm425, %v1769, %v68
  %v1771 = vrot.slane %v68, 4
  %v1772 = vsel %vm425, %v161, %v1771
  %v1774 = vunpack.c.l.s4 1983009808
  %v1775 = vunpack.c.0.s8 %v1774
  %v1776 = vperm.slane %v1770, %v1775
  %v1778 = vunpack.c.l.s4 1983009808
  %v1779 = vunpack.c.0.s8 %v1778
  %v1780 = vperm.slane %v1772, %v1779
  %v1781 = vrot.slane %v209, 4
  %v1782 = vsel %vm425, %v1781, %v113
  %v1783 = vrot.slane %v113, 4
  %v1784 = vsel %vm425, %v209, %v1783
  %v1786 = vunpack.c.l.s4 1983009808
  %v1787 = vunpack.c.0.s8 %v1786
  %v1788 = vperm.slane %v1782, %v1787
  %v1790 = vunpack.c.l.s4 1983009808
  %v1791 = vunpack.c.0.s8 %v1790
  %v1792 = vperm.slane %v1784, %v1791
  %v1793 = vrot.slane %v353, 4
  %v1794 = vsel %vm425, %v1793, %v257
  %v1795 = vrot.slane %v257, 4
  %v1796 = vsel %vm425, %v353, %v1795
  %v1798 = vunpack.c.l.s4 1983009808
  %v1799 = vunpack.c.0.s8 %v1798
  %v1800 = vperm.slane %v1794, %v1799
  %v1802 = vunpack.c.l.s4 1983009808
  %v1803 = vunpack.c.0.s8 %v1802
  %v1804 = vperm.slane %v1796, %v1803
  %v1805 = vrot.slane %v401, 4
  %v1806 = vsel %vm425, %v1805, %v305
  %v1807 = vrot.slane %v305, 4
  %v1808 = vsel %vm425, %v401, %v1807
  %v1810 = vunpack.c.l.s4 1983009808
  %v1811 = vunpack.c.0.s8 %v1810
  %v1812 = vperm.slane %v1806, %v1811
  %v1814 = vunpack.c.l.s4 1983009808
  %v1815 = vunpack.c.0.s8 %v1814
  %v1816 = vperm.slane %v1808, %v1815
  %v1817 = vrot.slane %v1788, 4
  %v1818 = vsel %vm425, %v1817, %v1776
  %v1819 = vrot.slane %v1776, 4
  %v1820 = vsel %vm425, %v1788, %v1819
  %v1822 = vunpack.c.l.s4 1934713408
  %v1823 = vunpack.c.0.s8 %v1822
  %v1824 = vperm.slane %v1818, %v1823
  %v1826 = vunpack.c.l.s4 1934713408
  %v1827 = vunpack.c.0.s8 %v1826
  %v1828 = vperm.slane %v1820, %v1827
  %v1829 = vrot.slane %v1792, 4
  %v1830 = vsel %vm425, %v1829, %v1780
  %v1831 = vrot.slane %v1780, 4
  %v1832 = vsel %vm425, %v1792, %v1831
  %v1834 = vunpack.c.l.s4 1934713408
  %v1835 = vunpack.c.0.s8 %v1834
  %v1836 = vperm.slane %v1830, %v1835
  %v1838 = vunpack.c.l.s4 1934713408
  %v1839 = vunpack.c.0.s8 %v1838
  %v1840 = vperm.slane %v1832, %v1839
  %v1841 = vrot.slane %v1812, 4
  %v1842 = vsel %vm425, %v1841, %v1800
  %v1843 = vrot.slane %v1800, 4
  %v1844 = vsel %vm425, %v1812, %v1843
  %v1846 = vunpack.c.l.s4 1934713408
  %v1847 = vunpack.c.0.s8 %v1846
  %v1848 = vperm.slane %v1842, %v1847
  %v1850 = vunpack.c.l.s4 1934713408
  %v1851 = vunpack.c.0.s8 %v1850
  %v1852 = vperm.slane %v1844, %v1851
  %v1853 = vrot.slane %v1816, 4
  %v1854 = vsel %vm425, %v1853, %v1804
  %v1855 = vrot.slane %v1804, 4
  %v1856 = vsel %vm425, %v1816, %v1855
  %v1858 = vunpack.c.l.s4 1934713408
  %v1859 = vunpack.c.0.s8 %v1858
  %v1860 = vperm.slane %v1854, %v1859
  %v1862 = vunpack.c.l.s4 1934713408
  %v1863 = vunpack.c.0.s8 %v1862
  %v1864 = vperm.slane %v1856, %v1863
  %v1865 = vrot.slane %v1848, 4
  %v1866 = vsel %vm425, %v1865, %v1824
  %v1867 = vrot.slane %v1824, 4
  %v1868 = vsel %vm425, %v1848, %v1867
  %v1869 = vrot.slane %v1852, 4
  %v1870 = vsel %vm425, %v1869, %v1828
  %v1871 = vrot.slane %v1828, 4
  %v1872 = vsel %vm425, %v1852, %v1871
  %v1873 = vrot.slane %v1860, 4
  %v1874 = vsel %vm425, %v1873, %v1836
  %v1875 = vrot.slane %v1836, 4
  %v1876 = vsel %vm425, %v1860, %v1875
  %v1877 = vrot.slane %v1864, 4
  %v1878 = vsel %vm425, %v1877, %v1840
  %v1879 = vrot.slane %v1840, 4
  %v1880 = vsel %vm425, %v1864, %v1879
  %v1881 = vrot.slane %v163, 4
  %v1882 = vsel %vm425, %v1881, %v69
  %v1883 = vrot.slane %v69, 4
  %v1884 = vsel %vm425, %v163, %v1883
  %v1886 = vunpack.c.l.s4 1983009808
  %v1887 = vunpack.c.0.s8 %v1886
  %v1888 = vperm.slane %v1882, %v1887
  %v1890 = vunpack.c.l.s4 1983009808
  %v1891 = vunpack.c.0.s8 %v1890
  %v1892 = vperm.slane %v1884, %v1891
  %v1893 = vrot.slane %v211, 4
  %v1894 = vsel %vm425, %v1893, %v115
  %v1895 = vrot.slane %v115, 4
  %v1896 = vsel %vm425, %v211, %v1895
  %v1898 = vunpack.c.l.s4 1983009808
  %v1899 = vunpack.c.0.s8 %v1898
  %v1900 = vperm.slane %v1894, %v1899
  %v1902 = vunpack.c.l.s4 1983009808
  %v1903 = vunpack.c.0.s8 %v1902
  %v1904 = vperm.slane %v1896, %v1903
  %v1905 = vrot.slane %v355, 4
  %v1906 = vsel %vm425, %v1905, %v259
  %v1907 = vrot.slane %v259, 4
  %v1908 = vsel %vm425, %v355, %v1907
  %v1910 = vunpack.c.l.s4 1983009808
  %v1911 = vunpack.c.0.s8 %v1910
  %v1912 = vperm.slane %v1906, %v1911
  %v1914 = vunpack.c.l.s4 1983009808
  %v1915 = vunpack.c.0.s8 %v1914
  %v1916 = vperm.slane %v1908, %v1915
  %v1917 = vrot.slane %v403, 4
  %v1918 = vsel %vm425, %v1917, %v307
  %v1919 = vrot.slane %v307, 4
  %v1920 = vsel %vm425, %v403, %v1919
  %v1922 = vunpack.c.l.s4 1983009808
  %v1923 = vunpack.c.0.s8 %v1922
  %v1924 = vperm.slane %v1918, %v1923
  %v1926 = vunpack.c.l.s4 1983009808
  %v1927 = vunpack.c.0.s8 %v1926
  %v1928 = vperm.slane %v1920, %v1927
  %v1929 = vrot.slane %v1900, 4
  %v1930 = vsel %vm425, %v1929, %v1888
  %v1931 = vrot.slane %v1888, 4
  %v1932 = vsel %vm425, %v1900, %v1931
  %v1934 = vunpack.c.l.s4 1934713408
  %v1935 = vunpack.c.0.s8 %v1934
  %v1936 = vperm.slane %v1930, %v1935
  %v1938 = vunpack.c.l.s4 1934713408
  %v1939 = vunpack.c.0.s8 %v1938
  %v1940 = vperm.slane %v1932, %v1939
  %v1941 = vrot.slane %v1904, 4
  %v1942 = vsel %vm425, %v1941, %v1892
  %v1943 = vrot.slane %v1892, 4
  %v1944 = vsel %vm425, %v1904, %v1943
  %v1946 = vunpack.c.l.s4 1934713408
  %v1947 = vunpack.c.0.s8 %v1946
  %v1948 = vperm.slane %v1942, %v1947
  %v1950 = vunpack.c.l.s4 1934713408
  %v1951 = vunpack.c.0.s8 %v1950
  %v1952 = vperm.slane %v1944, %v1951
  %v1953 = vrot.slane %v1924, 4
  %v1954 = vsel %vm425, %v1953, %v1912
  %v1955 = vrot.slane %v1912, 4
  %v1956 = vsel %vm425, %v1924, %v1955
  %v1958 = vunpack.c.l.s4 1934713408
  %v1959 = vunpack.c.0.s8 %v1958
  %v1960 = vperm.slane %v1954, %v1959
  %v1962 = vunpack.c.l.s4 1934713408
  %v1963 = vunpack.c.0.s8 %v1962
  %v1964 = vperm.slane %v1956, %v1963
  %v1965 = vrot.slane %v1928, 4
  %v1966 = vsel %vm425, %v1965, %v1916
  %v1967 = vrot.slane %v1916, 4
  %v1968 = vsel %vm425, %v1928, %v1967
  %v1970 = vunpack.c.l.s4 1934713408
  %v1971 = vunpack.c.0.s8 %v1970
  %v1972 = vperm.slane %v1966, %v1971
  %v1974 = vunpack.c.l.s4 1934713408
  %v1975 = vunpack.c.0.s8 %v1974
  %v1976 = vperm.slane %v1968, %v1975
  %v1977 = vrot.slane %v1960, 4
  %v1978 = vsel %vm425, %v1977, %v1936
  %v1979 = vrot.slane %v1936, 4
  %v1980 = vsel %vm425, %v1960, %v1979
  %v1981 = vrot.slane %v1964, 4
  %v1982 = vsel %vm425, %v1981, %v1940
  %v1983 = vrot.slane %v1940, 4
  %v1984 = vsel %vm425, %v1964, %v1983
  %v1985 = vrot.slane %v1972, 4
  %v1986 = vsel %vm425, %v1985, %v1948
  %v1987 = vrot.slane %v1948, 4
  %v1988 = vsel %vm425, %v1972, %v1987
  %v1989 = vrot.slane %v1976, 4
  %v1990 = vsel %vm425, %v1989, %v1952
  %v1991 = vrot.slane %v1952, 4
  %v1992 = vsel %vm425, %v1976, %v1991
  %v1993 = vrot.slane %v165, 4
  %v1994 = vsel %vm425, %v1993, %v70
  %v1995 = vrot.slane %v70, 4
  %v1996 = vsel %vm425, %v165, %v1995
  %v1998 = vunpack.c.l.s4 1983009808
  %v1999 = vunpack.c.0.s8 %v1998
  %v2000 = vperm.slane %v1994, %v1999
  %v2002 = vunpack.c.l.s4 1983009808
  %v2003 = vunpack.c.0.s8 %v2002
  %v2004 = vperm.slane %v1996, %v2003
  %v2005 = vrot.slane %v213, 4
  %v2006 = vsel %vm425, %v2005, %v117
  %v2007 = vrot.slane %v117, 4
  %v2008 = vsel %vm425, %v213, %v2007
  %v2010 = vunpack.c.l.s4 1983009808
  %v2011 = vunpack.c.0.s8 %v2010
  %v2012 = vperm.slane %v2006, %v2011
  %v2014 = vunpack.c.l.s4 1983009808
  %v2015 = vunpack.c.0.s8 %v2014
  %v2016 = vperm.slane %v2008, %v2015
  %v2017 = vrot.slane %v357, 4
  %v2018 = vsel %vm425, %v2017, %v261
  %v2019 = vrot.slane %v261, 4
  %v2020 = vsel %vm425, %v357, %v2019
  %v2022 = vunpack.c.l.s4 1983009808
  %v2023 = vunpack.c.0.s8 %v2022
  %v2024 = vperm.slane %v2018, %v2023
  %v2026 = vunpack.c.l.s4 1983009808
  %v2027 = vunpack.c.0.s8 %v2026
  %v2028 = vperm.slane %v2020, %v2027
  %v2029 = vrot.slane %v405, 4
  %v2030 = vsel %vm425, %v2029, %v309
  %v2031 = vrot.slane %v309, 4
  %v2032 = vsel %vm425, %v405, %v2031
  %v2034 = vunpack.c.l.s4 1983009808
  %v2035 = vunpack.c.0.s8 %v2034
  %v2036 = vperm.slane %v2030, %v2035
  %v2038 = vunpack.c.l.s4 1983009808
  %v2039 = vunpack.c.0.s8 %v2038
  %v2040 = vperm.slane %v2032, %v2039
  %v2041 = vrot.slane %v2012, 4
  %v2042 = vsel %vm425, %v2041, %v2000
  %v2043 = vrot.slane %v2000, 4
  %v2044 = vsel %vm425, %v2012, %v2043
  %v2046 = vunpack.c.l.s4 1934713408
  %v2047 = vunpack.c.0.s8 %v2046
  %v2048 = vperm.slane %v2042, %v2047
  %v2050 = vunpack.c.l.s4 1934713408
  %v2051 = vunpack.c.0.s8 %v2050
  %v2052 = vperm.slane %v2044, %v2051
  %v2053 = vrot.slane %v2016, 4
  %v2054 = vsel %vm425, %v2053, %v2004
  %v2055 = vrot.slane %v2004, 4
  %v2056 = vsel %vm425, %v2016, %v2055
  %v2058 = vunpack.c.l.s4 1934713408
  %v2059 = vunpack.c.0.s8 %v2058
  %v2060 = vperm.slane %v2054, %v2059
  %v2062 = vunpack.c.l.s4 1934713408
  %v2063 = vunpack.c.0.s8 %v2062
  %v2064 = vperm.slane %v2056, %v2063
  %v2065 = vrot.slane %v2036, 4
  %v2066 = vsel %vm425, %v2065, %v2024
  %v2067 = vrot.slane %v2024, 4
  %v2068 = vsel %vm425, %v2036, %v2067
  %v2070 = vunpack.c.l.s4 1934713408
  %v2071 = vunpack.c.0.s8 %v2070
  %v2072 = vperm.slane %v2066, %v2071
  %v2074 = vunpack.c.l.s4 1934713408
  %v2075 = vunpack.c.0.s8 %v2074
  %v2076 = vperm.slane %v2068, %v2075
  %v2077 = vrot.slane %v2040, 4
  %v2078 = vsel %vm425, %v2077, %v2028
  %v2079 = vrot.slane %v2028, 4
  %v2080 = vsel %vm425, %v2040, %v2079
  %v2082 = vunpack.c.l.s4 1934713408
  %v2083 = vunpack.c.0.s8 %v2082
  %v2084 = vperm.slane %v2078, %v2083
  %v2086 = vunpack.c.l.s4 1934713408
  %v2087 = vunpack.c.0.s8 %v2086
  %v2088 = vperm.slane %v2080, %v2087
  %v2089 = vrot.slane %v2072, 4
  %v2090 = vsel %vm425, %v2089, %v2048
  %v2091 = vrot.slane %v2048, 4
  %v2092 = vsel %vm425, %v2072, %v2091
  %v2093 = vrot.slane %v2076, 4
  %v2094 = vsel %vm425, %v2093, %v2052
  %v2095 = vrot.slane %v2052, 4
  %v2096 = vsel %vm425, %v2076, %v2095
  %v2097 = vrot.slane %v2084, 4
  %v2098 = vsel %vm425, %v2097, %v2060
  %v2099 = vrot.slane %v2060, 4
  %v2100 = vsel %vm425, %v2084, %v2099
  %v2101 = vrot.slane %v2088, 4
  %v2102 = vsel %vm425, %v2101, %v2064
  %v2103 = vrot.slane %v2064, 4
  %v2104 = vsel %vm425, %v2088, %v2103
  %v2105 = vrot.slane %v167, 4
  %v2106 = vsel %vm425, %v2105, %v71
  %v2107 = vrot.slane %v71, 4
  %v2108 = vsel %vm425, %v167, %v2107
  %v2110 = vunpack.c.l.s4 1983009808
  %v2111 = vunpack.c.0.s8 %v2110
  %v2112 = vperm.slane %v2106, %v2111
  %v2114 = vunpack.c.l.s4 1983009808
  %v2115 = vunpack.c.0.s8 %v2114
  %v2116 = vperm.slane %v2108, %v2115
  %v2117 = vrot.slane %v215, 4
  %v2118 = vsel %vm425, %v2117, %v119
  %v2119 = vrot.slane %v119, 4
  %v2120 = vsel %vm425, %v215, %v2119
  %v2122 = vunpack.c.l.s4 1983009808
  %v2123 = vunpack.c.0.s8 %v2122
  %v2124 = vperm.slane %v2118, %v2123
  %v2126 = vunpack.c.l.s4 1983009808
  %v2127 = vunpack.c.0.s8 %v2126
  %v2128 = vperm.slane %v2120, %v2127
  %v2129 = vrot.slane %v359, 4
  %v2130 = vsel %vm425, %v2129, %v263
  %v2131 = vrot.slane %v263, 4
  %v2132 = vsel %vm425, %v359, %v2131
  %v2134 = vunpack.c.l.s4 1983009808
  %v2135 = vunpack.c.0.s8 %v2134
  %v2136 = vperm.slane %v2130, %v2135
  %v2138 = vunpack.c.l.s4 1983009808
  %v2139 = vunpack.c.0.s8 %v2138
  %v2140 = vperm.slane %v2132, %v2139
  %v2141 = vrot.slane %v407, 4
  %v2142 = vsel %vm425, %v2141, %v311
  %v2143 = vrot.slane %v311, 4
  %v2144 = vsel %vm425, %v407, %v2143
  %v2146 = vunpack.c.l.s4 1983009808
  %v2147 = vunpack.c.0.s8 %v2146
  %v2148 = vperm.slane %v2142, %v2147
  %v2150 = vunpack.c.l.s4 1983009808
  %v2151 = vunpack.c.0.s8 %v2150
  %v2152 = vperm.slane %v2144, %v2151
  %v2153 = vrot.slane %v2124, 4
  %v2154 = vsel %vm425, %v2153, %v2112
  %v2155 = vrot.slane %v2112, 4
  %v2156 = vsel %vm425, %v2124, %v2155
  %v2158 = vunpack.c.l.s4 1934713408
  %v2159 = vunpack.c.0.s8 %v2158
  %v2160 = vperm.slane %v2154, %v2159
  %v2162 = vunpack.c.l.s4 1934713408
  %v2163 = vunpack.c.0.s8 %v2162
  %v2164 = vperm.slane %v2156, %v2163
  %v2165 = vrot.slane %v2128, 4
  %v2166 = vsel %vm425, %v2165, %v2116
  %v2167 = vrot.slane %v2116, 4
  %v2168 = vsel %vm425, %v2128, %v2167
  %v2170 = vunpack.c.l.s4 1934713408
  %v2171 = vunpack.c.0.s8 %v2170
  %v2172 = vperm.slane %v2166, %v2171
  %v2174 = vunpack.c.l.s4 1934713408
  %v2175 = vunpack.c.0.s8 %v2174
  %v2176 = vperm.slane %v2168, %v2175
  %v2177 = vrot.slane %v2148, 4
  %v2178 = vsel %vm425, %v2177, %v2136
  %v2179 = vrot.slane %v2136, 4
  %v2180 = vsel %vm425, %v2148, %v2179
  %v2182 = vunpack.c.l.s4 1934713408
  %v2183 = vunpack.c.0.s8 %v2182
  %v2184 = vperm.slane %v2178, %v2183
  %v2186 = vunpack.c.l.s4 1934713408
  %v2187 = vunpack.c.0.s8 %v2186
  %v2188 = vperm.slane %v2180, %v2187
  %v2189 = vrot.slane %v2152, 4
  %v2190 = vsel %vm425, %v2189, %v2140
  %v2191 = vrot.slane %v2140, 4
  %v2192 = vsel %vm425, %v2152, %v2191
  %v2194 = vunpack.c.l.s4 1934713408
  %v2195 = vunpack.c.0.s8 %v2194
  %v2196 = vperm.slane %v2190, %v2195
  %v2198 = vunpack.c.l.s4 1934713408
  %v2199 = vunpack.c.0.s8 %v2198
  %v2200 = vperm.slane %v2192, %v2199
  %v2201 = vrot.slane %v2184, 4
  %v2202 = vsel %vm425, %v2201, %v2160
  %v2203 = vrot.slane %v2160, 4
  %v2204 = vsel %vm425, %v2184, %v2203
  %v2205 = vrot.slane %v2188, 4
  %v2206 = vsel %vm425, %v2205, %v2164
  %v2207 = vrot.slane %v2164, 4
  %v2208 = vsel %vm425, %v2188, %v2207
  %v2209 = vrot.slane %v2196, 4
  %v2210 = vsel %vm425, %v2209, %v2172
  %v2211 = vrot.slane %v2172, 4
  %v2212 = vsel %vm425, %v2196, %v2211
  %v2213 = vrot.slane %v2200, 4
  %v2214 = vsel %vm425, %v2213, %v2176
  %v2215 = vrot.slane %v2176, 4
  %v2216 = vsel %vm425, %v2200, %v2215
  %vm2217 = vcmask 15360
  %v2218 = vsel %vm2217, %v522, -inf
  %2219 = vmax.xlane.f32.xlu0 %v2218
  %v2220 = vpop.xlane.xlu0 %2219
  %v2221 = vsel %vm2217, %v524, -inf
  %2222 = vmax.xlane.f32.xlu0 %v2221
  %v2223 = vpop.xlane.xlu0 %2222
  %v2224 = vsel %vm2217, %v526, -inf
  %2225 = vmax.xlane.f32.xlu0 %v2224
  %v2226 = vpop.xlane.xlu0 %2225
  %v2227 = vsel %vm2217, %v528, -inf
  %2228 = vmax.xlane.f32.xlu0 %v2227
  %v2229 = vpop.xlane.xlu0 %2228
  %v2230 = vsel %vm2217, %v530, -inf
  %2231 = vmax.xlane.f32.xlu0 %v2230
  %v2232 = vpop.xlane.xlu0 %2231
  %v2233 = vsel %vm2217, %v532, -inf
  %2234 = vmax.xlane.f32.xlu0 %v2233
  %v2235 = vpop.xlane.xlu0 %2234
  %v2236 = vsel %vm2217, %v534, -inf
  %2237 = vmax.xlane.f32.xlu0 %v2236
  %v2238 = vpop.xlane.xlu0 %2237
  %v2239 = vsel %vm2217, %v536, -inf
  %2240 = vmax.xlane.f32.xlu0 %v2239
  %v2241 = vpop.xlane.xlu0 %2240
  %v2242 = vsel %vm2217, %v634, -inf
  %2243 = vmax.xlane.f32.xlu0 %v2242
  %v2244 = vpop.xlane.xlu0 %2243
  %v2245 = vsel %vm2217, %v636, -inf
  %2246 = vmax.xlane.f32.xlu0 %v2245
  %v2247 = vpop.xlane.xlu0 %2246
  %v2248 = vsel %vm2217, %v638, -inf
  %2249 = vmax.xlane.f32.xlu0 %v2248
  %v2250 = vpop.xlane.xlu0 %2249
  %v2251 = vsel %vm2217, %v640, -inf
  %2252 = vmax.xlane.f32.xlu0 %v2251
  %v2253 = vpop.xlane.xlu0 %2252
  %v2254 = vsel %vm2217, %v642, -inf
  %2255 = vmax.xlane.f32.xlu0 %v2254
  %v2256 = vpop.xlane.xlu0 %2255
  %v2257 = vsel %vm2217, %v644, -inf
  %2258 = vmax.xlane.f32.xlu0 %v2257
  %v2259 = vpop.xlane.xlu0 %2258
  %v2260 = vsel %vm2217, %v646, -inf
  %2261 = vmax.xlane.f32.xlu0 %v2260
  %v2262 = vpop.xlane.xlu0 %2261
  %v2263 = vsel %vm2217, %v648, -inf
  %2264 = vmax.xlane.f32.xlu0 %v2263
  %v2265 = vpop.xlane.xlu0 %2264
  %v2266 = vsel %vm2217, %v746, -inf
  %2267 = vmax.xlane.f32.xlu0 %v2266
  %v2268 = vpop.xlane.xlu0 %2267
  %v2269 = vsel %vm2217, %v748, -inf
  %2270 = vmax.xlane.f32.xlu0 %v2269
  %v2271 = vpop.xlane.xlu0 %2270
  %v2272 = vsel %vm2217, %v750, -inf
  %2273 = vmax.xlane.f32.xlu0 %v2272
  %v2274 = vpop.xlane.xlu0 %2273
  %v2275 = vsel %vm2217, %v752, -inf
  %2276 = vmax.xlane.f32.xlu0 %v2275
  %v2277 = vpop.xlane.xlu0 %2276
  %v2278 = vsel %vm2217, %v754, -inf
  %2279 = vmax.xlane.f32.xlu0 %v2278
  %v2280 = vpop.xlane.xlu0 %2279
  %v2281 = vsel %vm2217, %v756, -inf
  %2282 = vmax.xlane.f32.xlu0 %v2281
  %v2283 = vpop.xlane.xlu0 %2282
  %v2284 = vsel %vm2217, %v758, -inf
  %2285 = vmax.xlane.f32.xlu0 %v2284
  %v2286 = vpop.xlane.xlu0 %2285
  %v2287 = vsel %vm2217, %v760, -inf
  %2288 = vmax.xlane.f32.xlu0 %v2287
  %v2289 = vpop.xlane.xlu0 %2288
  %v2290 = vsel %vm2217, %v858, -inf
  %2291 = vmax.xlane.f32.xlu0 %v2290
  %v2292 = vpop.xlane.xlu0 %2291
  %v2293 = vsel %vm2217, %v860, -inf
  %2294 = vmax.xlane.f32.xlu0 %v2293
  %v2295 = vpop.xlane.xlu0 %2294
  %v2296 = vsel %vm2217, %v862, -inf
  %2297 = vmax.xlane.f32.xlu0 %v2296
  %v2298 = vpop.xlane.xlu0 %2297
  %v2299 = vsel %vm2217, %v864, -inf
  %2300 = vmax.xlane.f32.xlu0 %v2299
  %v2301 = vpop.xlane.xlu0 %2300
  %v2302 = vsel %vm2217, %v866, -inf
  %2303 = vmax.xlane.f32.xlu0 %v2302
  %v2304 = vpop.xlane.xlu0 %2303
  %v2305 = vsel %vm2217, %v868, -inf
  %2306 = vmax.xlane.f32.xlu0 %v2305
  %v2307 = vpop.xlane.xlu0 %2306
  %v2308 = vsel %vm2217, %v870, -inf
  %2309 = vmax.xlane.f32.xlu0 %v2308
  %v2310 = vpop.xlane.xlu0 %2309
  %v2311 = vsel %vm2217, %v872, -inf
  %2312 = vmax.xlane.f32.xlu0 %v2311
  %v2313 = vpop.xlane.xlu0 %2312
  %v2314 = vsel %vm2217, %v970, -inf
  %2315 = vmax.xlane.f32.xlu0 %v2314
  %v2316 = vpop.xlane.xlu0 %2315
  %v2317 = vsel %vm2217, %v972, -inf
  %2318 = vmax.xlane.f32.xlu0 %v2317
  %v2319 = vpop.xlane.xlu0 %2318
  %v2320 = vsel %vm2217, %v974, -inf
  %2321 = vmax.xlane.f32.xlu0 %v2320
  %v2322 = vpop.xlane.xlu0 %2321
  %v2323 = vsel %vm2217, %v976, -inf
  %2324 = vmax.xlane.f32.xlu0 %v2323
  %v2325 = vpop.xlane.xlu0 %2324
  %v2326 = vsel %vm2217, %v978, -inf
  %2327 = vmax.xlane.f32.xlu0 %v2326
  %v2328 = vpop.xlane.xlu0 %2327
  %v2329 = vsel %vm2217, %v980, -inf
  %2330 = vmax.xlane.f32.xlu0 %v2329
  %v2331 = vpop.xlane.xlu0 %2330
  %v2332 = vsel %vm2217, %v982, -inf
  %2333 = vmax.xlane.f32.xlu0 %v2332
  %v2334 = vpop.xlane.xlu0 %2333
  %v2335 = vsel %vm2217, %v984, -inf
  %2336 = vmax.xlane.f32.xlu0 %v2335
  %v2337 = vpop.xlane.xlu0 %2336
  %v2338 = vsel %vm2217, %v1082, -inf
  %2339 = vmax.xlane.f32.xlu0 %v2338
  %v2340 = vpop.xlane.xlu0 %2339
  %v2341 = vsel %vm2217, %v1084, -inf
  %2342 = vmax.xlane.f32.xlu0 %v2341
  %v2343 = vpop.xlane.xlu0 %2342
  %v2344 = vsel %vm2217, %v1086, -inf
  %2345 = vmax.xlane.f32.xlu0 %v2344
  %v2346 = vpop.xlane.xlu0 %2345
  %v2347 = vsel %vm2217, %v1088, -inf
  %2348 = vmax.xlane.f32.xlu0 %v2347
  %v2349 = vpop.xlane.xlu0 %2348
  %v2350 = vsel %vm2217, %v1090, -inf
  %2351 = vmax.xlane.f32.xlu0 %v2350
  %v2352 = vpop.xlane.xlu0 %2351
  %v2353 = vsel %vm2217, %v1092, -inf
  %2354 = vmax.xlane.f32.xlu0 %v2353
  %v2355 = vpop.xlane.xlu0 %2354
  %v2356 = vsel %vm2217, %v1094, -inf
  %2357 = vmax.xlane.f32.xlu0 %v2356
  %v2358 = vpop.xlane.xlu0 %2357
  %v2359 = vsel %vm2217, %v1096, -inf
  %2360 = vmax.xlane.f32.xlu0 %v2359
  %v2361 = vpop.xlane.xlu0 %2360
  %v2362 = vsel %vm2217, %v1194, -inf
  %2363 = vmax.xlane.f32.xlu0 %v2362
  %v2364 = vpop.xlane.xlu0 %2363
  %v2365 = vsel %vm2217, %v1196, -inf
  %2366 = vmax.xlane.f32.xlu0 %v2365
  %v2367 = vpop.xlane.xlu0 %2366
  %v2368 = vsel %vm2217, %v1198, -inf
  %2369 = vmax.xlane.f32.xlu0 %v2368
  %v2370 = vpop.xlane.xlu0 %2369
  %v2371 = vsel %vm2217, %v1200, -inf
  %2372 = vmax.xlane.f32.xlu0 %v2371
  %v2373 = vpop.xlane.xlu0 %2372
  %v2374 = vsel %vm2217, %v1202, -inf
  %2375 = vmax.xlane.f32.xlu0 %v2374
  %v2376 = vpop.xlane.xlu0 %2375
  %v2377 = vsel %vm2217, %v1204, -inf
  %2378 = vmax.xlane.f32.xlu0 %v2377
  %v2379 = vpop.xlane.xlu0 %2378
  %v2380 = vsel %vm2217, %v1206, -inf
  %2381 = vmax.xlane.f32.xlu0 %v2380
  %v2382 = vpop.xlane.xlu0 %2381
  %v2383 = vsel %vm2217, %v1208, -inf
  %2384 = vmax.xlane.f32.xlu0 %v2383
  %v2385 = vpop.xlane.xlu0 %2384
  %v2386 = vsel %vm2217, %v1306, -inf
  %2387 = vmax.xlane.f32.xlu0 %v2386
  %v2388 = vpop.xlane.xlu0 %2387
  %v2389 = vsel %vm2217, %v1308, -inf
  %2390 = vmax.xlane.f32.xlu0 %v2389
  %v2391 = vpop.xlane.xlu0 %2390
  %v2392 = vsel %vm2217, %v1310, -inf
  %2393 = vmax.xlane.f32.xlu0 %v2392
  %v2394 = vpop.xlane.xlu0 %2393
  %v2395 = vsel %vm2217, %v1312, -inf
  %2396 = vmax.xlane.f32.xlu0 %v2395
  %v2397 = vpop.xlane.xlu0 %2396
  %v2398 = vsel %vm2217, %v1314, -inf
  %2399 = vmax.xlane.f32.xlu0 %v2398
  %v2400 = vpop.xlane.xlu0 %2399
  %v2401 = vsel %vm2217, %v1316, -inf
  %2402 = vmax.xlane.f32.xlu0 %v2401
  %v2403 = vpop.xlane.xlu0 %2402
  %v2404 = vsel %vm2217, %v1318, -inf
  %2405 = vmax.xlane.f32.xlu0 %v2404
  %v2406 = vpop.xlane.xlu0 %2405
  %v2407 = vsel %vm2217, %v1320, -inf
  %2408 = vmax.xlane.f32.xlu0 %v2407
  %v2409 = vpop.xlane.xlu0 %2408
  %v2410 = vsel %vm2217, %v1418, -inf
  %2411 = vmax.xlane.f32.xlu0 %v2410
  %v2412 = vpop.xlane.xlu0 %2411
  %v2413 = vsel %vm2217, %v1420, -inf
  %2414 = vmax.xlane.f32.xlu0 %v2413
  %v2415 = vpop.xlane.xlu0 %2414
  %v2416 = vsel %vm2217, %v1422, -inf
  %2417 = vmax.xlane.f32.xlu0 %v2416
  %v2418 = vpop.xlane.xlu0 %2417
  %v2419 = vsel %vm2217, %v1424, -inf
  %2420 = vmax.xlane.f32.xlu0 %v2419
  %v2421 = vpop.xlane.xlu0 %2420
  %v2422 = vsel %vm2217, %v1426, -inf
  %2423 = vmax.xlane.f32.xlu0 %v2422
  %v2424 = vpop.xlane.xlu0 %2423
  %v2425 = vsel %vm2217, %v1428, -inf
  %2426 = vmax.xlane.f32.xlu0 %v2425
  %v2427 = vpop.xlane.xlu0 %2426
  %v2428 = vsel %vm2217, %v1430, -inf
  %2429 = vmax.xlane.f32.xlu0 %v2428
  %v2430 = vpop.xlane.xlu0 %2429
  %v2431 = vsel %vm2217, %v1432, -inf
  %2432 = vmax.xlane.f32.xlu0 %v2431
  %v2433 = vpop.xlane.xlu0 %2432
  %v2434 = vsel %vm2217, %v1530, -inf
  %2435 = vmax.xlane.f32.xlu0 %v2434
  %v2436 = vpop.xlane.xlu0 %2435
  %v2437 = vsel %vm2217, %v1532, -inf
  %2438 = vmax.xlane.f32.xlu0 %v2437
  %v2439 = vpop.xlane.xlu0 %2438
  %v2440 = vsel %vm2217, %v1534, -inf
  %2441 = vmax.xlane.f32.xlu0 %v2440
  %v2442 = vpop.xlane.xlu0 %2441
  %v2443 = vsel %vm2217, %v1536, -inf
  %2444 = vmax.xlane.f32.xlu0 %v2443
  %v2445 = vpop.xlane.xlu0 %2444
  %v2446 = vsel %vm2217, %v1538, -inf
  %2447 = vmax.xlane.f32.xlu0 %v2446
  %v2448 = vpop.xlane.xlu0 %2447
  %v2449 = vsel %vm2217, %v1540, -inf
  %2450 = vmax.xlane.f32.xlu0 %v2449
  %v2451 = vpop.xlane.xlu0 %2450
  %v2452 = vsel %vm2217, %v1542, -inf
  %2453 = vmax.xlane.f32.xlu0 %v2452
  %v2454 = vpop.xlane.xlu0 %2453
  %v2455 = vsel %vm2217, %v1544, -inf
  %2456 = vmax.xlane.f32.xlu0 %v2455
  %v2457 = vpop.xlane.xlu0 %2456
  %v2458 = vsel %vm2217, %v1642, -inf
  %2459 = vmax.xlane.f32.xlu0 %v2458
  %v2460 = vpop.xlane.xlu0 %2459
  %v2461 = vsel %vm2217, %v1644, -inf
  %2462 = vmax.xlane.f32.xlu0 %v2461
  %v2463 = vpop.xlane.xlu0 %2462
  %v2464 = vsel %vm2217, %v1646, -inf
  %2465 = vmax.xlane.f32.xlu0 %v2464
  %v2466 = vpop.xlane.xlu0 %2465
  %v2467 = vsel %vm2217, %v1648, -inf
  %2468 = vmax.xlane.f32.xlu0 %v2467
  %v2469 = vpop.xlane.xlu0 %2468
  %v2470 = vsel %vm2217, %v1650, -inf
  %2471 = vmax.xlane.f32.xlu0 %v2470
  %v2472 = vpop.xlane.xlu0 %2471
  %v2473 = vsel %vm2217, %v1652, -inf
  %2474 = vmax.xlane.f32.xlu0 %v2473
  %v2475 = vpop.xlane.xlu0 %2474
  %v2476 = vsel %vm2217, %v1654, -inf
  %2477 = vmax.xlane.f32.xlu0 %v2476
  %v2478 = vpop.xlane.xlu0 %2477
  %v2479 = vsel %vm2217, %v1656, -inf
  %2480 = vmax.xlane.f32.xlu0 %v2479
  %v2481 = vpop.xlane.xlu0 %2480
  %v2482 = vsel %vm2217, %v1754, -inf
  %2483 = vmax.xlane.f32.xlu0 %v2482
  %v2484 = vpop.xlane.xlu0 %2483
  %v2485 = vsel %vm2217, %v1756, -inf
  %2486 = vmax.xlane.f32.xlu0 %v2485
  %v2487 = vpop.xlane.xlu0 %2486
  %v2488 = vsel %vm2217, %v1758, -inf
  %2489 = vmax.xlane.f32.xlu0 %v2488
  %v2490 = vpop.xlane.xlu0 %2489
  %v2491 = vsel %vm2217, %v1760, -inf
  %2492 = vmax.xlane.f32.xlu0 %v2491
  %v2493 = vpop.xlane.xlu0 %2492
  %v2494 = vsel %vm2217, %v1762, -inf
  %2495 = vmax.xlane.f32.xlu0 %v2494
  %v2496 = vpop.xlane.xlu0 %2495
  %v2497 = vsel %vm2217, %v1764, -inf
  %2498 = vmax.xlane.f32.xlu0 %v2497
  %v2499 = vpop.xlane.xlu0 %2498
  %v2500 = vsel %vm2217, %v1766, -inf
  %2501 = vmax.xlane.f32.xlu0 %v2500
  %v2502 = vpop.xlane.xlu0 %2501
  %v2503 = vsel %vm2217, %v1768, -inf
  %2504 = vmax.xlane.f32.xlu0 %v2503
  %v2505 = vpop.xlane.xlu0 %2504
  %v2506 = vsel %vm2217, %v1866, -inf
  %2507 = vmax.xlane.f32.xlu0 %v2506
  %v2508 = vpop.xlane.xlu0 %2507
  %v2509 = vsel %vm2217, %v1868, -inf
  %2510 = vmax.xlane.f32.xlu0 %v2509
  %v2511 = vpop.xlane.xlu0 %2510
  %v2512 = vsel %vm2217, %v1870, -inf
  %2513 = vmax.xlane.f32.xlu0 %v2512
  %v2514 = vpop.xlane.xlu0 %2513
  %v2515 = vsel %vm2217, %v1872, -inf
  %2516 = vmax.xlane.f32.xlu0 %v2515
  %v2517 = vpop.xlane.xlu0 %2516
  %v2518 = vsel %vm2217, %v1874, -inf
  %2519 = vmax.xlane.f32.xlu0 %v2518
  %v2520 = vpop.xlane.xlu0 %2519
  %v2521 = vsel %vm2217, %v1876, -inf
  %2522 = vmax.xlane.f32.xlu0 %v2521
  %v2523 = vpop.xlane.xlu0 %2522
  %v2524 = vsel %vm2217, %v1878, -inf
  %2525 = vmax.xlane.f32.xlu0 %v2524
  %v2526 = vpop.xlane.xlu0 %2525
  %v2527 = vsel %vm2217, %v1880, -inf
  %2528 = vmax.xlane.f32.xlu0 %v2527
  %v2529 = vpop.xlane.xlu0 %2528
  %v2530 = vsel %vm2217, %v1978, -inf
  %2531 = vmax.xlane.f32.xlu0 %v2530
  %v2532 = vpop.xlane.xlu0 %2531
  %v2533 = vsel %vm2217, %v1980, -inf
  %2534 = vmax.xlane.f32.xlu0 %v2533
  %v2535 = vpop.xlane.xlu0 %2534
  %v2536 = vsel %vm2217, %v1982, -inf
  %2537 = vmax.xlane.f32.xlu0 %v2536
  %v2538 = vpop.xlane.xlu0 %2537
  %v2539 = vsel %vm2217, %v1984, -inf
  %2540 = vmax.xlane.f32.xlu0 %v2539
  %v2541 = vpop.xlane.xlu0 %2540
  %v2542 = vsel %vm2217, %v1986, -inf
  %2543 = vmax.xlane.f32.xlu0 %v2542
  %v2544 = vpop.xlane.xlu0 %2543
  %v2545 = vsel %vm2217, %v1988, -inf
  %2546 = vmax.xlane.f32.xlu0 %v2545
  %v2547 = vpop.xlane.xlu0 %2546
  %v2548 = vsel %vm2217, %v1990, -inf
  %2549 = vmax.xlane.f32.xlu0 %v2548
  %v2550 = vpop.xlane.xlu0 %2549
  %v2551 = vsel %vm2217, %v1992, -inf
  %2552 = vmax.xlane.f32.xlu0 %v2551
  %v2553 = vpop.xlane.xlu0 %2552
  %v2554 = vsel %vm2217, %v2090, -inf
  %2555 = vmax.xlane.f32.xlu0 %v2554
  %v2556 = vpop.xlane.xlu0 %2555
  %v2557 = vsel %vm2217, %v2092, -inf
  %2558 = vmax.xlane.f32.xlu0 %v2557
  %v2559 = vpop.xlane.xlu0 %2558
  %v2560 = vsel %vm2217, %v2094, -inf
  %2561 = vmax.xlane.f32.xlu0 %v2560
  %v2562 = vpop.xlane.xlu0 %2561
  %v2563 = vsel %vm2217, %v2096, -inf
  %2564 = vmax.xlane.f32.xlu0 %v2563
  %v2565 = vpop.xlane.xlu0 %2564
  %v2566 = vsel %vm2217, %v2098, -inf
  %2567 = vmax.xlane.f32.xlu0 %v2566
  %v2568 = vpop.xlane.xlu0 %2567
  %v2569 = vsel %vm2217, %v2100, -inf
  %2570 = vmax.xlane.f32.xlu0 %v2569
  %v2571 = vpop.xlane.xlu0 %2570
  %v2572 = vsel %vm2217, %v2102, -inf
  %2573 = vmax.xlane.f32.xlu0 %v2572
  %v2574 = vpop.xlane.xlu0 %2573
  %v2575 = vsel %vm2217, %v2104, -inf
  %2576 = vmax.xlane.f32.xlu0 %v2575
  %v2577 = vpop.xlane.xlu0 %2576
  %v2578 = vsel %vm2217, %v2202, -inf
  %2579 = vmax.xlane.f32.xlu0 %v2578
  %v2580 = vpop.xlane.xlu0 %2579
  %v2581 = vsel %vm2217, %v2204, -inf
  %2582 = vmax.xlane.f32.xlu0 %v2581
  %v2583 = vpop.xlane.xlu0 %2582
  %v2584 = vsel %vm2217, %v2206, -inf
  %2585 = vmax.xlane.f32.xlu0 %v2584
  %v2586 = vpop.xlane.xlu0 %2585
  %v2587 = vsel %vm2217, %v2208, -inf
  %2588 = vmax.xlane.f32.xlu0 %v2587
  %v2589 = vpop.xlane.xlu0 %2588
  %v2590 = vsel %vm2217, %v2210, -inf
  %2591 = vmax.xlane.f32.xlu0 %v2590
  %v2592 = vpop.xlane.xlu0 %2591
  %v2593 = vsel %vm2217, %v2212, -inf
  %2594 = vmax.xlane.f32.xlu0 %v2593
  %v2595 = vpop.xlane.xlu0 %2594
  %v2596 = vsel %vm2217, %v2214, -inf
  %2597 = vmax.xlane.f32.xlu0 %v2596
  %v2598 = vpop.xlane.xlu0 %2597
  %v2599 = vsel %vm2217, %v2216, -inf
  %2600 = vmax.xlane.f32.xlu0 %v2599
  %v2601 = vpop.xlane.xlu0 %2600
  %v2602 = vmax.f32 %v2220, %v2223
  %v2603 = vmax.f32 %v2226, %v2229
  %v2604 = vmax.f32 %v2232, %v2235
  %v2605 = vmax.f32 %v2238, %v2241
  %v2606 = vmax.f32 %v2244, %v2247
  %v2607 = vmax.f32 %v2250, %v2253
  %v2608 = vmax.f32 %v2256, %v2259
  %v2609 = vmax.f32 %v2262, %v2265
  %v2610 = vmax.f32 %v2268, %v2271
  %v2611 = vmax.f32 %v2274, %v2277
  %v2612 = vmax.f32 %v2280, %v2283
  %v2613 = vmax.f32 %v2286, %v2289
  %v2614 = vmax.f32 %v2292, %v2295
  %v2615 = vmax.f32 %v2298, %v2301
  %v2616 = vmax.f32 %v2304, %v2307
  %v2617 = vmax.f32 %v2310, %v2313
  %v2618 = vmax.f32 %v2316, %v2319
  %v2619 = vmax.f32 %v2322, %v2325
  %v2620 = vmax.f32 %v2328, %v2331
  %v2621 = vmax.f32 %v2334, %v2337
  %v2622 = vmax.f32 %v2340, %v2343
  %v2623 = vmax.f32 %v2346, %v2349
  %v2624 = vmax.f32 %v2352, %v2355
  %v2625 = vmax.f32 %v2358, %v2361
  %v2626 = vmax.f32 %v2364, %v2367
  %v2627 = vmax.f32 %v2370, %v2373
  %v2628 = vmax.f32 %v2376, %v2379
  %v2629 = vmax.f32 %v2382, %v2385
  %v2630 = vmax.f32 %v2388, %v2391
  %v2631 = vmax.f32 %v2394, %v2397
  %v2632 = vmax.f32 %v2400, %v2403
  %v2633 = vmax.f32 %v2406, %v2409
  %v2634 = vmax.f32 %v2412, %v2415
  %v2635 = vmax.f32 %v2418, %v2421
  %v2636 = vmax.f32 %v2424, %v2427
  %v2637 = vmax.f32 %v2430, %v2433
  %v2638 = vmax.f32 %v2436, %v2439
  %v2639 = vmax.f32 %v2442, %v2445
  %v2640 = vmax.f32 %v2448, %v2451
  %v2641 = vmax.f32 %v2454, %v2457
  %v2642 = vmax.f32 %v2460, %v2463
  %v2643 = vmax.f32 %v2466, %v2469
  %v2644 = vmax.f32 %v2472, %v2475
  %v2645 = vmax.f32 %v2478, %v2481
  %v2646 = vmax.f32 %v2484, %v2487
  %v2647 = vmax.f32 %v2490, %v2493
  %v2648 = vmax.f32 %v2496, %v2499
  %v2649 = vmax.f32 %v2502, %v2505
  %v2650 = vmax.f32 %v2508, %v2511
  %v2651 = vmax.f32 %v2514, %v2517
  %v2652 = vmax.f32 %v2520, %v2523
  %v2653 = vmax.f32 %v2526, %v2529
  %v2654 = vmax.f32 %v2532, %v2535
  %v2655 = vmax.f32 %v2538, %v2541
  %v2656 = vmax.f32 %v2544, %v2547
  %v2657 = vmax.f32 %v2550, %v2553
  %v2658 = vmax.f32 %v2556, %v2559
  %v2659 = vmax.f32 %v2562, %v2565
  %v2660 = vmax.f32 %v2568, %v2571
  %v2661 = vmax.f32 %v2574, %v2577
  %v2662 = vmax.f32 %v2580, %v2583
  %v2663 = vmax.f32 %v2586, %v2589
  %v2664 = vmax.f32 %v2592, %v2595
  %v2665 = vmax.f32 %v2598, %v2601
  %v2730 = vlaneseq
  %v2731 = vand.u32 %v2730, 127
  %v2732 = vperm.slane %v2602, %v2731
  %v2733 = vperm.slane %v2603, %v2731
  %v2734 = vperm.slane %v2604, %v2731
  %v2735 = vperm.slane %v2605, %v2731
  %v2736 = vperm.slane %v2606, %v2731
  %v2737 = vperm.slane %v2607, %v2731
  %v2738 = vperm.slane %v2608, %v2731
  %v2739 = vperm.slane %v2609, %v2731
  %v2740 = vperm.slane %v2610, %v2731
  %v2741 = vperm.slane %v2611, %v2731
  %v2742 = vperm.slane %v2612, %v2731
  %v2743 = vperm.slane %v2613, %v2731
  %v2744 = vperm.slane %v2614, %v2731
  %v2745 = vperm.slane %v2615, %v2731
  %v2746 = vperm.slane %v2616, %v2731
  %v2747 = vperm.slane %v2617, %v2731
  %v2748 = vperm.slane %v2618, %v2731
  %v2749 = vperm.slane %v2619, %v2731
  %v2750 = vperm.slane %v2620, %v2731
  %v2751 = vperm.slane %v2621, %v2731
  %v2752 = vperm.slane %v2622, %v2731
  %v2753 = vperm.slane %v2623, %v2731
  %v2754 = vperm.slane %v2624, %v2731
  %v2755 = vperm.slane %v2625, %v2731
  %v2756 = vperm.slane %v2626, %v2731
  %v2757 = vperm.slane %v2627, %v2731
  %v2758 = vperm.slane %v2628, %v2731
  %v2759 = vperm.slane %v2629, %v2731
  %v2760 = vperm.slane %v2630, %v2731
  %v2761 = vperm.slane %v2631, %v2731
  %v2762 = vperm.slane %v2632, %v2731
  %v2763 = vperm.slane %v2633, %v2731
  %v2764 = vperm.slane %v2634, %v2731
  %v2765 = vperm.slane %v2635, %v2731
  %v2766 = vperm.slane %v2636, %v2731
  %v2767 = vperm.slane %v2637, %v2731
  %v2768 = vperm.slane %v2638, %v2731
  %v2769 = vperm.slane %v2639, %v2731
  %v2770 = vperm.slane %v2640, %v2731
  %v2771 = vperm.slane %v2641, %v2731
  %v2772 = vperm.slane %v2642, %v2731
  %v2773 = vperm.slane %v2643, %v2731
  %v2774 = vperm.slane %v2644, %v2731
  %v2775 = vperm.slane %v2645, %v2731
  %v2776 = vperm.slane %v2646, %v2731
  %v2777 = vperm.slane %v2647, %v2731
  %v2778 = vperm.slane %v2648, %v2731
  %v2779 = vperm.slane %v2649, %v2731
  %v2780 = vperm.slane %v2650, %v2731
  %v2781 = vperm.slane %v2651, %v2731
  %v2782 = vperm.slane %v2652, %v2731
  %v2783 = vperm.slane %v2653, %v2731
  %v2784 = vperm.slane %v2654, %v2731
  %v2785 = vperm.slane %v2655, %v2731
  %v2786 = vperm.slane %v2656, %v2731
  %v2787 = vperm.slane %v2657, %v2731
  %v2788 = vperm.slane %v2658, %v2731
  %v2789 = vperm.slane %v2659, %v2731
  %v2790 = vperm.slane %v2660, %v2731
  %v2791 = vperm.slane %v2661, %v2731
  %v2792 = vperm.slane %v2662, %v2731
  %v2793 = vperm.slane %v2663, %v2731
  %v2794 = vperm.slane %v2664, %v2731
  %v2795 = vperm.slane %v2665, %v2731
  %vm2796 = vcmask 1041409
  %v2797 = vsel %vm2796, %v2733, %v2732
  %vm2798 = vcmask 1042434
  %v2799 = vsel %vm2798, %v2734, %v2797
  %vm2800 = vcmask 1043459
  %v2801 = vsel %vm2800, %v2735, %v2799
  %vm2802 = vcmask 1044484
  %v2803 = vsel %vm2802, %v2736, %v2801
  %vm2804 = vcmask 1045509
  %v2805 = vsel %vm2804, %v2737, %v2803
  %vm2806 = vcmask 1046534
  %v2807 = vsel %vm2806, %v2738, %v2805
  %vm2808 = vcmask 1047559
  %v2809 = vsel %vm2808, %v2739, %v2807
  %v2810 = vsel %vm2796, %v2741, %v2740
  %v2811 = vsel %vm2798, %v2742, %v2810
  %v2812 = vsel %vm2800, %v2743, %v2811
  %v2813 = vsel %vm2802, %v2744, %v2812
  %v2814 = vsel %vm2804, %v2745, %v2813
  %v2815 = vsel %vm2806, %v2746, %v2814
  %v2816 = vsel %vm2808, %v2747, %v2815
  %v2817 = vsel %vm2796, %v2749, %v2748
  %v2818 = vsel %vm2798, %v2750, %v2817
  %v2819 = vsel %vm2800, %v2751, %v2818
  %v2820 = vsel %vm2802, %v2752, %v2819
  %v2821 = vsel %vm2804, %v2753, %v2820
  %v2822 = vsel %vm2806, %v2754, %v2821
  %v2823 = vsel %vm2808, %v2755, %v2822
  %v2824 = vsel %vm2796, %v2757, %v2756
  %v2825 = vsel %vm2798, %v2758, %v2824
  %v2826 = vsel %vm2800, %v2759, %v2825
  %v2827 = vsel %vm2802, %v2760, %v2826
  %v2828 = vsel %vm2804, %v2761, %v2827
  %v2829 = vsel %vm2806, %v2762, %v2828
  %v2830 = vsel %vm2808, %v2763, %v2829
  %v2831 = vsel %vm2796, %v2765, %v2764
  %v2832 = vsel %vm2798, %v2766, %v2831
  %v2833 = vsel %vm2800, %v2767, %v2832
  %v2834 = vsel %vm2802, %v2768, %v2833
  %v2835 = vsel %vm2804, %v2769, %v2834
  %v2836 = vsel %vm2806, %v2770, %v2835
  %v2837 = vsel %vm2808, %v2771, %v2836
  %v2838 = vsel %vm2796, %v2773, %v2772
  %v2839 = vsel %vm2798, %v2774, %v2838
  %v2840 = vsel %vm2800, %v2775, %v2839
  %v2841 = vsel %vm2802, %v2776, %v2840
  %v2842 = vsel %vm2804, %v2777, %v2841
  %v2843 = vsel %vm2806, %v2778, %v2842
  %v2844 = vsel %vm2808, %v2779, %v2843
  %v2845 = vsel %vm2796, %v2781, %v2780
  %v2846 = vsel %vm2798, %v2782, %v2845
  %v2847 = vsel %vm2800, %v2783, %v2846
  %v2848 = vsel %vm2802, %v2784, %v2847
  %v2849 = vsel %vm2804, %v2785, %v2848
  %v2850 = vsel %vm2806, %v2786, %v2849
  %v2851 = vsel %vm2808, %v2787, %v2850
  %v2852 = vsel %vm2796, %v2789, %v2788
  %v2853 = vsel %vm2798, %v2790, %v2852
  %v2854 = vsel %vm2800, %v2791, %v2853
  %v2855 = vsel %vm2802, %v2792, %v2854
  %v2856 = vsel %vm2804, %v2793, %v2855
  %v2857 = vsel %vm2806, %v2794, %v2856
  %v2858 = vsel %vm2808, %v2795, %v2857
  %vm2867 = vcmask 64512
  %2868 = vst.msk [vmem:[%s1] sm:$0xff] %vm2867, %v2809
  %2869 = vst.msk [vmem:[%s1 + $0x8] sm:$0xff] %vm2867, %v2816
  %2870 = vst.msk [vmem:[%s1 + $0x10] sm:$0xff] %vm2867, %v2823
  %2871 = vst.msk [vmem:[%s1 + $0x18] sm:$0xff] %vm2867, %v2830
  %2872 = vst.msk [vmem:[%s1 + $0x20] sm:$0xff] %vm2867, %v2837
  %2873 = vst.msk [vmem:[%s1 + $0x28] sm:$0xff] %vm2867, %v2844
  %2874 = vst.msk [vmem:[%s1 + $0x30] sm:$0xff] %vm2867, %v2851
  %2875 = vst.msk [vmem:[%s1 + $0x38] sm:$0xff] %vm2867, %v2858
  // Predicated region
  $region6: #{tpu_custom_call.1} parent=0 // pred_check
    _
  $region7: #{tpu_custom_call.1} parent=0 // pred_check_branch
    %2877 = sbr.rel (0) target = $region9
  $region8: #{tpu_custom_call.1} parent=0 // pred_region
    _
  $region9: #{tpu_custom_call.1} parent=0 // pred_fallthru
    _
  // Predicated region
  $region10: #{tpu_custom_call.1} parent=0 // pred_check
    _
  $region11: #{tpu_custom_call.1} parent=0 // pred_check_branch
    %2879 = sbr.rel (0) target = $region13
  $region12: #{tpu_custom_call.1} parent=0 // pred_region
    _
  $region13: #{tpu_custom_call.1} parent=0 // pred_fallthru
    _

</llo_original>
